<compile_context>
chip_gen: v5e
topology: v5e:2x2
jax: 0.10.0
libtpu: 0.0.40
codegen_flags: <defaults>
</compile_context>

<pallas_src>
import functools

import jax
import jax.numpy as jnp
from jax.experimental import pallas as pl
from jax.experimental.pallas import tpu as pltpu


def _mish(v):
    # Mish(x) = x * tanh(softplus(x)).  Overflow-safe softplus: for any finite
    # v (including garbage in padded rows), exp(-|v|) <= 1 so no inf/NaN is
    # produced.  Exactly the PyTorch Mish semantics (to f32 rounding).
    sp = jnp.maximum(v, 0.0) + jnp.log(1.0 + jnp.exp(-jnp.abs(v)))
    return v * jnp.tanh(sp)


def mlp_kernel(x_ref, w1_ref, b1_ref, w2_ref, b2_ref, w3_ref, b3_ref, o_ref,
               *, mm_dtype):
    """Fused 3-layer MLP: (Linear + Mish) x 3, entirely in VMEM.

    Matmul operands are cast to `mm_dtype` (bf16 by default) in-kernel so the
    MXU runs at its native rate; accumulation (preferred_element_type),
    bias-add and Mish stay in f32.
    """
    x = x_ref[...].astype(mm_dtype)
    h = jnp.dot(x, w1_ref[...].astype(mm_dtype),
                preferred_element_type=jnp.float32)
    h = _mish(h + b1_ref[...])

    h = jnp.dot(h.astype(mm_dtype), w2_ref[...].astype(mm_dtype),
                preferred_element_type=jnp.float32)
    h = _mish(h + b2_ref[...])

    h = jnp.dot(h.astype(mm_dtype), w3_ref[...].astype(mm_dtype),
                preferred_element_type=jnp.float32)
    o_ref[...] = _mish(h + b3_ref[...]).astype(o_ref.dtype)


def _detect_num_tensorcores():
    """TensorCores sharing the grid on one chip: 1 on v5e/v6e, 2 on v7x.

    Defensive probe; falls back to 1 (always correct, only suboptimal on v7x).
    """
    try:
        info = pltpu.get_tpu_info()
        for name in ("num_cores", "core_count", "num_tensorcores",
                     "tensorcore_count"):
            n = getattr(info, name, None)
            if isinstance(n, int) and n > 0:
                return n
    except Exception:
        pass
    return 1


def _choose_block_b(batch, requested, num_cores):
    """Pick the batch-tile size.

    * num_cores == 1 (v5e/v6e): the grid is a sequential loop on one TC, so
      use the biggest tile that fits `requested` — for small batches that is
      a single full-batch block (no wasted ~0.35us grid steps).
    * num_cores > 1 (v7x): round the number of grid steps up to a multiple of
      the core count and give every step a (near-)equal tile so both cores
      get balanced work with no ragged tail block.
    Tiles are multiples of 16 rows (bf16 sublane packing).  A block larger
    than the batch is fine: Pallas pads, padded rows flow through the
    (overflow-safe) Mish and are never written back.
    """
    cdiv = lambda a, b: -(-a // b)
    bb = min(requested, batch)
    if num_cores > 1 and batch > 16 * num_cores:
        steps = max(num_cores, cdiv(batch, bb))
        steps = cdiv(steps, num_cores) * num_cores   # multiple of core count
        bb = cdiv(batch, steps)                      # balanced tiles
    bb = max(16, cdiv(bb, 16) * 16)
    return bb


@functools.partial(
    jax.jit, static_argnames=("block_b", "matmul_dtype", "num_cores"))
def mlp_forward(x, w1, b1, w2, b2, w3, b3, *,
                block_b=4096, matmul_dtype=jnp.bfloat16, num_cores=None):
    B, D_in = x.shape
    h1 = w1.shape[1]
    h2 = w2.shape[1]
    D_out = w3.shape[1]

    nc = num_cores if num_cores is not None else _detect_num_tensorcores()
    bb = _choose_block_b(B, block_b, nc)
    grid = (pl.cdiv(B, bb),)

    # No wrapper-side casts of x / weights (they would add an extra HBM round
    # trip): the kernel casts matmul operands itself.  Biases are tiny; keep
    # them f32 so the bias-add / Mish path is f32.
    b1f = b1.astype(jnp.float32)
    b2f = b2.astype(jnp.float32)
    b3f = b3.astype(jnp.float32)

    kernel = functools.partial(mlp_kernel, mm_dtype=matmul_dtype)

    # x / out are tiled over the batch axis; weights & biases are fully
    # VMEM-resident and reused by every grid step (constant index_map).
    # VMEM use even at bb=8192 is a few MiB -> no vmem_limit_bytes needed.
    return pl.pallas_call(
        kernel,
        out_shape=jax.ShapeDtypeStruct((B, D_out), jnp.float32),
        grid_spec=pl.GridSpec(
            grid=grid,
            in_specs=[
                pl.BlockSpec((bb, D_in), lambda i: (i, 0)),
                pl.BlockSpec((D_in, h1), lambda i: (0, 0)),
                pl.BlockSpec((1, h1), lambda i: (0, 0)),
                pl.BlockSpec((h1, h2), lambda i: (0, 0)),
                pl.BlockSpec((1, h2), lambda i: (0, 0)),
                pl.BlockSpec((h2, D_out), lambda i: (0, 0)),
                pl.BlockSpec((1, D_out), lambda i: (0, 0)),
            ],
            out_specs=pl.BlockSpec((bb, D_out), lambda i: (i, 0)),
        ),
        compiler_params=pltpu.CompilerParams(
            dimension_semantics=("parallel",)),
    )(x, w1, b1f, w2, b2f, w3, b3f)


def xavier_uniform(key, fan_in, fan_out, dtype=jnp.float32):
    limit = jnp.sqrt(6.0 / (fan_in + fan_out)).astype(dtype)
    # Stored already transposed to [in, out] for the kernel layout.
    return jax.random.uniform(
        key, (fan_in, fan_out), dtype=dtype, minval=-limit, maxval=limit)


def reference_forward(x, w1, b1, w2, b2, w3, b3, matmul_dtype=jnp.float32):
    # Pure-JAX reference using the *same* Mish helper as the kernel.
    def layer(h, w, b):
        z = jnp.dot(h.astype(matmul_dtype), w.astype(matmul_dtype),
                    preferred_element_type=jnp.float32) + b
        return _mish(z)

    h = layer(x, w1, b1)
    h = layer(h, w2, b2)
    return layer(h, w3, b3)


if __name__ == "__main__":
    # Small shapes consistent with the module: MLP on [batch, input_dim].
    batch = 256
    input_dim = 32
    hidden = [64, 64]    # default num_neurons
    output_dim = 16

    key = jax.random.PRNGKey(0)
    kx, k1, k2, k3 = jax.random.split(key, 4)

    x = jax.random.normal(kx, (batch, input_dim), dtype=jnp.float32)

    # Deterministic xavier-uniform weights, zero biases (biases as [1, out]).
    w1 = xavier_uniform(k1, input_dim, hidden[0])
    b1 = jnp.zeros((1, hidden[0]), jnp.float32)
    w2 = xavier_uniform(k2, hidden[0], hidden[1])
    b2 = jnp.zeros((1, hidden[1]), jnp.float32)
    w3 = xavier_uniform(k3, hidden[1], output_dim)
    b3 = jnp.zeros((1, output_dim), jnp.float32)

    out = jax.block_until_ready(mlp_forward(x, w1, b1, w2, b2, w3, b3))

    # Reference with matched bf16 matmul operands and identical Mish math
    # -> tight tolerance.  Pure-f32 reference -> looser tolerance (bf16
    # operand rounding only).
    ref_bf16 = reference_forward(x, w1, b1, w2, b2, w3, b3,
                                 matmul_dtype=jnp.bfloat16)
    ref_f32 = reference_forward(x, w1, b1, w2, b2, w3, b3,
                                matmul_dtype=jnp.float32)

    assert out.shape == (batch, output_dim)
    assert jnp.allclose(out, ref_bf16, atol=1e-2, rtol=1e-2)
    assert jnp.allclose(out, ref_f32, atol=5e-2, rtol=5e-2)

    print("KERNEL_OK")
</pallas_src>

<mosaic_0001>
module attributes {stable_mosaic.version = 11 : i64} {
  func.func @mlp_kernel(%arg0: i32, %arg1: memref<256x32xf32, #tpu.memory_space<vmem>>, %arg2: memref<32x64xf32, #tpu.memory_space<vmem>>, %arg3: memref<1x64xf32, #tpu.memory_space<vmem>>, %arg4: memref<64x64xf32, #tpu.memory_space<vmem>>, %arg5: memref<1x64xf32, #tpu.memory_space<vmem>>, %arg6: memref<64x16xf32, #tpu.memory_space<vmem>>, %arg7: memref<1x16xf32, #tpu.memory_space<vmem>>, %arg8: memref<256x16xf32, #tpu.memory_space<vmem>>) attributes {dimension_semantics = [#tpu.dimension_semantics<parallel>], iteration_bounds = array<i64: 1>, scalar_prefetch = 0 : i64, scratch_operands = 0 : i64, tpu.core_type = #tpu.core_type<tc>, window_params = [{transform_indices = @transform_0, window_bounds = array<i64: 256, 32>}, {pipeline_mode = #tpu.pipeline_mode<synchronous>, transform_indices = @transform_1, window_bounds = array<i64: 32, 64>}, {pipeline_mode = #tpu.pipeline_mode<synchronous>, transform_indices = @transform_2, window_bounds = array<i64: 1, 64>}, {pipeline_mode = #tpu.pipeline_mode<synchronous>, transform_indices = @transform_3, window_bounds = array<i64: 64, 64>}, {pipeline_mode = #tpu.pipeline_mode<synchronous>, transform_indices = @transform_4, window_bounds = array<i64: 1, 64>}, {pipeline_mode = #tpu.pipeline_mode<synchronous>, transform_indices = @transform_5, window_bounds = array<i64: 64, 16>}, {pipeline_mode = #tpu.pipeline_mode<synchronous>, transform_indices = @transform_6, window_bounds = array<i64: 1, 16>}, {transform_indices = @transform_7, window_bounds = array<i64: 256, 16>}]} {
    %c0 = arith.constant 0 : index
    %c0_0 = arith.constant 0 : index
    %0 = vector.load %arg1[%c0, %c0_0] : memref<256x32xf32, #tpu.memory_space<vmem>>, vector<256x32xf32>
    %1 = arith.truncf %0 : vector<256x32xf32> to vector<256x32xbf16>
    %c0_1 = arith.constant 0 : index
    %c0_2 = arith.constant 0 : index
    %2 = vector.load %arg2[%c0_1, %c0_2] : memref<32x64xf32, #tpu.memory_space<vmem>>, vector<32x64xf32>
    %3 = arith.truncf %2 : vector<32x64xf32> to vector<32x64xbf16>
    %cst = arith.constant dense<0.000000e+00> : vector<256x64xf32>
    %4 = tpu.matmul %1, %3, %cst {dimension_numbers = #tpu.dot_dimension_numbers<[1], [0], [0], [1], [0, 0, 1, 1], [], []>} : vector<256x32xbf16>, vector<32x64xbf16>, vector<256x64xf32> -> vector<256x64xf32>
    %c0_3 = arith.constant 0 : index
    %c0_4 = arith.constant 0 : index
    %5 = vector.load %arg3[%c0_3, %c0_4] : memref<1x64xf32, #tpu.memory_space<vmem>>, vector<1x64xf32>
    %6 = vector.broadcast %5 : vector<1x64xf32> to vector<256x64xf32>
    %7 = arith.addf %4, %6 : vector<256x64xf32>
    %cst_5 = arith.constant 0.000000e+00 : f32
    %8 = vector.broadcast %cst_5 : f32 to vector<256x64xf32>
    %9 = arith.maximumf %7, %8 : vector<256x64xf32>
    %10 = math.absf %7 : vector<256x64xf32>
    %cst_6 = arith.constant 0.000000e+00 : f32
    %11 = vector.broadcast %cst_6 : f32 to vector<256x64xf32>
    %12 = arith.subf %11, %10 : vector<256x64xf32>
    %13 = math.exp %12 : vector<256x64xf32>
    %cst_7 = arith.constant 1.000000e+00 : f32
    %14 = vector.broadcast %cst_7 : f32 to vector<256x64xf32>
    %15 = arith.addf %14, %13 : vector<256x64xf32>
    %16 = math.log %15 : vector<256x64xf32>
    %17 = arith.addf %9, %16 : vector<256x64xf32>
    %18 = math.tanh %17 : vector<256x64xf32>
    %19 = arith.mulf %7, %18 : vector<256x64xf32>
    %20 = arith.truncf %19 : vector<256x64xf32> to vector<256x64xbf16>
    %c0_8 = arith.constant 0 : index
    %c0_9 = arith.constant 0 : index
    %21 = vector.load %arg4[%c0_8, %c0_9] : memref<64x64xf32, #tpu.memory_space<vmem>>, vector<64x64xf32>
    %22 = arith.truncf %21 : vector<64x64xf32> to vector<64x64xbf16>
    %cst_10 = arith.constant dense<0.000000e+00> : vector<256x64xf32>
    %23 = tpu.matmul %20, %22, %cst_10 {dimension_numbers = #tpu.dot_dimension_numbers<[1], [0], [0], [1], [0, 0, 1, 1], [], []>} : vector<256x64xbf16>, vector<64x64xbf16>, vector<256x64xf32> -> vector<256x64xf32>
    %c0_11 = arith.constant 0 : index
    %c0_12 = arith.constant 0 : index
    %24 = vector.load %arg5[%c0_11, %c0_12] : memref<1x64xf32, #tpu.memory_space<vmem>>, vector<1x64xf32>
    %25 = vector.broadcast %24 : vector<1x64xf32> to vector<256x64xf32>
    %26 = arith.addf %23, %25 : vector<256x64xf32>
    %cst_13 = arith.constant 0.000000e+00 : f32
    %27 = vector.broadcast %cst_13 : f32 to vector<256x64xf32>
    %28 = arith.maximumf %26, %27 : vector<256x64xf32>
    %29 = math.absf %26 : vector<256x64xf32>
    %cst_14 = arith.constant 0.000000e+00 : f32
    %30 = vector.broadcast %cst_14 : f32 to vector<256x64xf32>
    %31 = arith.subf %30, %29 : vector<256x64xf32>
    %32 = math.exp %31 : vector<256x64xf32>
    %cst_15 = arith.constant 1.000000e+00 : f32
    %33 = vector.broadcast %cst_15 : f32 to vector<256x64xf32>
    %34 = arith.addf %33, %32 : vector<256x64xf32>
    %35 = math.log %34 : vector<256x64xf32>
    %36 = arith.addf %28, %35 : vector<256x64xf32>
    %37 = math.tanh %36 : vector<256x64xf32>
    %38 = arith.mulf %26, %37 : vector<256x64xf32>
    %39 = arith.truncf %38 : vector<256x64xf32> to vector<256x64xbf16>
    %c0_16 = arith.constant 0 : index
    %c0_17 = arith.constant 0 : index
    %40 = vector.load %arg6[%c0_16, %c0_17] : memref<64x16xf32, #tpu.memory_space<vmem>>, vector<64x16xf32>
    %41 = arith.truncf %40 : vector<64x16xf32> to vector<64x16xbf16>
    %cst_18 = arith.constant dense<0.000000e+00> : vector<256x16xf32>
    %42 = tpu.matmul %39, %41, %cst_18 {dimension_numbers = #tpu.dot_dimension_numbers<[1], [0], [0], [1], [0, 0, 1, 1], [], []>} : vector<256x64xbf16>, vector<64x16xbf16>, vector<256x16xf32> -> vector<256x16xf32>
    %c0_19 = arith.constant 0 : index
    %c0_20 = arith.constant 0 : index
    %43 = vector.load %arg7[%c0_19, %c0_20] : memref<1x16xf32, #tpu.memory_space<vmem>>, vector<1x16xf32>
    %44 = vector.broadcast %43 : vector<1x16xf32> to vector<256x16xf32>
    %45 = arith.addf %42, %44 : vector<256x16xf32>
    %cst_21 = arith.constant 0.000000e+00 : f32
    %46 = vector.broadcast %cst_21 : f32 to vector<256x16xf32>
    %47 = arith.maximumf %45, %46 : vector<256x16xf32>
    %48 = math.absf %45 : vector<256x16xf32>
    %cst_22 = arith.constant 0.000000e+00 : f32
    %49 = vector.broadcast %cst_22 : f32 to vector<256x16xf32>
    %50 = arith.subf %49, %48 : vector<256x16xf32>
    %51 = math.exp %50 : vector<256x16xf32>
    %cst_23 = arith.constant 1.000000e+00 : f32
    %52 = vector.broadcast %cst_23 : f32 to vector<256x16xf32>
    %53 = arith.addf %52, %51 : vector<256x16xf32>
    %54 = math.log %53 : vector<256x16xf32>
    %55 = arith.addf %47, %54 : vector<256x16xf32>
    %56 = math.tanh %55 : vector<256x16xf32>
    %57 = arith.mulf %45, %56 : vector<256x16xf32>
    %c0_24 = arith.constant 0 : index
    %c0_25 = arith.constant 0 : index
    %58 = vector.load %arg8[%c0_24, %c0_25] : memref<256x16xf32, #tpu.memory_space<vmem>>, vector<256x16xf32>
    tpu.vector_store %arg8[%c0_24, %c0_25], %57 {strides = array<i32>} : memref<256x16xf32, #tpu.memory_space<vmem>>, vector<256x16xf32>,
    return
  }
  func.func @transform_0(%arg0: i32) -> (i32, i32) {
    %c0_i32 = arith.constant 0 : i32
    %c0_i32_0 = arith.constant 0 : i32
    return %arg0, %c0_i32 : i32, i32
  }
  func.func @transform_1(%arg0: i32) -> (i32, i32) {
    %c0_i32 = arith.constant 0 : i32
    %c0_i32_0 = arith.constant 0 : i32
    %c0_i32_1 = arith.constant 0 : i32
    return %c0_i32, %c0_i32_0 : i32, i32
  }
  func.func @transform_2(%arg0: i32) -> (i32, i32) {
    %c0_i32 = arith.constant 0 : i32
    %c0_i32_0 = arith.constant 0 : i32
    %c0_i32_1 = arith.constant 0 : i32
    return %c0_i32, %c0_i32_0 : i32, i32
  }
  func.func @transform_3(%arg0: i32) -> (i32, i32) {
    %c0_i32 = arith.constant 0 : i32
    %c0_i32_0 = arith.constant 0 : i32
    %c0_i32_1 = arith.constant 0 : i32
    return %c0_i32, %c0_i32_0 : i32, i32
  }
  func.func @transform_4(%arg0: i32) -> (i32, i32) {
    %c0_i32 = arith.constant 0 : i32
    %c0_i32_0 = arith.constant 0 : i32
    %c0_i32_1 = arith.constant 0 : i32
    return %c0_i32, %c0_i32_0 : i32, i32
  }
  func.func @transform_5(%arg0: i32) -> (i32, i32) {
    %c0_i32 = arith.constant 0 : i32
    %c0_i32_0 = arith.constant 0 : i32
    %c0_i32_1 = arith.constant 0 : i32
    return %c0_i32, %c0_i32_0 : i32, i32
  }
  func.func @transform_6(%arg0: i32) -> (i32, i32) {
    %c0_i32 = arith.constant 0 : i32
    %c0_i32_0 = arith.constant 0 : i32
    %c0_i32_1 = arith.constant 0 : i32
    return %c0_i32, %c0_i32_0 : i32, i32
  }
  func.func @transform_7(%arg0: i32) -> (i32, i32) {
    %c0_i32 = arith.constant 0 : i32
    %c0_i32_0 = arith.constant 0 : i32
    return %arg0, %c0_i32 : i32, i32
  }
}

</mosaic_0001>

<llo_original>
// kernel: mlp_forward.1
$region0: #{mlp_forward.1}
  #allocation0 [shape = 'u32[]', space=smem, size = 0x4, offset = 0x4, fixed_abs, tag = 'smem constant byte address 0x4 - core index']
  #allocation1 [shape = 'u32[72,128]{1,0:T(1,128)}', space=vmem, size = 0x9000, scoped, tag = 'internal scratch']
  %s0 = inlined_call_operand.vmem [shape: f32[256,32], index: 0, kind: input, shape index: {}]
  %s1 = inlined_call_operand.vmem [shape: f32[32,64], index: 1, kind: input, shape index: {}]
  %s2 = inlined_call_operand.vmem [shape: f32[1,64], index: 2, kind: input, shape index: {}]
  %s3 = inlined_call_operand.vmem [shape: f32[64,64], index: 3, kind: input, shape index: {}]
  %s4 = inlined_call_operand.vmem [shape: f32[1,64], index: 4, kind: input, shape index: {}]
  %s5 = inlined_call_operand.vmem [shape: f32[64,16], index: 5, kind: input, shape index: {}]
  %s6 = inlined_call_operand.vmem [shape: f32[1,16], index: 6, kind: input, shape index: {}]
  %s7 = inlined_call_operand.vmem [shape: f32[256,16], index: 7, kind: output, shape index: {}]
  %s8 = sld [smem:[#allocation0]]
  $region38: #{mlp_forward.1} parent=0
    _
  %s10 = ssub.s32 1, %s8
  %s11 = scalar_select 0, %s10, %s8
  // Predicated region
  $region2: #{mlp_forward.1} parent=0 // pred_check
    _
  $region3: #{mlp_forward.1} parent=0 // pred_check_branch
    %13 = sbr.rel (0) target = $region5
  $region4: #{mlp_forward.1} parent=0 // pred_region
    _
  $region5: #{mlp_forward.1} parent=0 // pred_fallthru
    _
  // Predicated region
  $region6: #{mlp_forward.1} parent=0 // pred_check
    _
  $region7: #{mlp_forward.1} parent=0 // pred_check_branch
    %15 = sbr.rel (0) target = $region9
  $region8: #{mlp_forward.1} parent=0 // pred_region
    _
  $region9: #{mlp_forward.1} parent=0 // pred_fallthru
    _
  // Predicated region
  $region10: #{mlp_forward.1} parent=0 // pred_check
    _
  $region11: #{mlp_forward.1} parent=0 // pred_check_branch
    %17 = sbr.rel (0) target = $region13
  $region12: #{mlp_forward.1} parent=0 // pred_region
    _
  $region13: #{mlp_forward.1} parent=0 // pred_fallthru
    _
  // Predicated region
  $region14: #{mlp_forward.1} parent=0 // pred_check
    _
  $region15: #{mlp_forward.1} parent=0 // pred_check_branch
    %19 = sbr.rel (0) target = $region17
  $region16: #{mlp_forward.1} parent=0 // pred_region
    _
  $region17: #{mlp_forward.1} parent=0 // pred_fallthru
    _
  // Predicated region
  $region18: #{mlp_forward.1} parent=0 // pred_check
    _
  $region19: #{mlp_forward.1} parent=0 // pred_check_branch
    %21 = sbr.rel (0) target = $region21
  $region20: #{mlp_forward.1} parent=0 // pred_region
    _
  $region21: #{mlp_forward.1} parent=0 // pred_fallthru
    _
  // Predicated region
  $region22: #{mlp_forward.1} parent=0 // pred_check
    _
  $region23: #{mlp_forward.1} parent=0 // pred_check_branch
    %23 = sbr.rel (0) target = $region25
  $region24: #{mlp_forward.1} parent=0 // pred_region
    _
  $region25: #{mlp_forward.1} parent=0 // pred_fallthru
    _
  // Predicated region
  $region26: #{mlp_forward.1} parent=0 // pred_check
    _
  $region27: #{mlp_forward.1} parent=0 // pred_check_branch
    %25 = sbr.rel (0) target = $region29
  $region28: #{mlp_forward.1} parent=0 // pred_region
    _
  $region29: #{mlp_forward.1} parent=0 // pred_fallthru
    _
  %v27 = vld [vmem:[%s0] sm:$0xff]
  %v28 = vld [vmem:[%s0 + $0x8] sm:$0xff]
  %v29 = vld [vmem:[%s0 + $0x10] sm:$0xff]
  %v30 = vld [vmem:[%s0 + $0x18] sm:$0xff]
  %v31 = vld [vmem:[%s0 + $0x20] sm:$0xff]
  %v32 = vld [vmem:[%s0 + $0x28] sm:$0xff]
  %v33 = vld [vmem:[%s0 + $0x30] sm:$0xff]
  %v34 = vld [vmem:[%s0 + $0x38] sm:$0xff]
  %v35 = vld [vmem:[%s0 + $0x40] sm:$0xff]
  %v36 = vld [vmem:[%s0 + $0x48] sm:$0xff]
  %v37 = vld [vmem:[%s0 + $0x50] sm:$0xff]
  %v38 = vld [vmem:[%s0 + $0x58] sm:$0xff]
  %v39 = vld [vmem:[%s0 + $0x60] sm:$0xff]
  %v40 = vld [vmem:[%s0 + $0x68] sm:$0xff]
  %v41 = vld [vmem:[%s0 + $0x70] sm:$0xff]
  %v42 = vld [vmem:[%s0 + $0x78] sm:$0xff]
  %v43 = vld [vmem:[%s0 + $0x80] sm:$0xff]
  %v44 = vld [vmem:[%s0 + $0x88] sm:$0xff]
  %v45 = vld [vmem:[%s0 + $0x90] sm:$0xff]
  %v46 = vld [vmem:[%s0 + $0x98] sm:$0xff]
  %v47 = vld [vmem:[%s0 + $0xa0] sm:$0xff]
  %v48 = vld [vmem:[%s0 + $0xa8] sm:$0xff]
  %v49 = vld [vmem:[%s0 + $0xb0] sm:$0xff]
  %v50 = vld [vmem:[%s0 + $0xb8] sm:$0xff]
  %v51 = vld [vmem:[%s0 + $0xc0] sm:$0xff]
  %v52 = vld [vmem:[%s0 + $0xc8] sm:$0xff]
  %v53 = vld [vmem:[%s0 + $0xd0] sm:$0xff]
  %v54 = vld [vmem:[%s0 + $0xd8] sm:$0xff]
  %v55 = vld [vmem:[%s0 + $0xe0] sm:$0xff]
  %v56 = vld [vmem:[%s0 + $0xe8] sm:$0xff]
  %v57 = vld [vmem:[%s0 + $0xf0] sm:$0xff]
  %v58 = vld [vmem:[%s0 + $0xf8] sm:$0xff]
  %v59 = vpack.c.bf16 %v28, %v27
  %v60 = vpack.c.bf16 %v30, %v29
  %v61 = vpack.c.bf16 %v32, %v31
  %v62 = vpack.c.bf16 %v34, %v33
  %v63 = vpack.c.bf16 %v36, %v35
  %v64 = vpack.c.bf16 %v38, %v37
  %v65 = vpack.c.bf16 %v40, %v39
  %v66 = vpack.c.bf16 %v42, %v41
  %v67 = vpack.c.bf16 %v44, %v43
  %v68 = vpack.c.bf16 %v46, %v45
  %v69 = vpack.c.bf16 %v48, %v47
  %v70 = vpack.c.bf16 %v50, %v49
  %v71 = vpack.c.bf16 %v52, %v51
  %v72 = vpack.c.bf16 %v54, %v53
  %v73 = vpack.c.bf16 %v56, %v55
  %v74 = vpack.c.bf16 %v58, %v57
  %v75 = vld [vmem:[%s1] sm:$0xff]
  %v76 = vld [vmem:[%s1 + $0x8] sm:$0xff]
  %v77 = vld [vmem:[%s1 + $0x10] sm:$0xff]
  %v78 = vld [vmem:[%s1 + $0x18] sm:$0xff]
  %v79 = vpack.c.bf16 %v76, %v75
  %v80 = vpack.c.bf16 %v78, %v77
  %v81 = vld [vmem:[%s2] sm:$0x1]
  %v83 = vperm.slane %v81, 0
  %vm85 = vcmask 261120
  %v87 = vsel %vm85, %v59, 0
  %v90 = vsel %vm85, %v60, 0
  %v93 = vsel %vm85, %v61, 0
  %v96 = vsel %vm85, %v62, 0
  %v99 = vsel %vm85, %v63, 0
  %v102 = vsel %vm85, %v64, 0
  %v105 = vsel %vm85, %v65, 0
  %v108 = vsel %vm85, %v66, 0
  %v111 = vsel %vm85, %v67, 0
  %v114 = vsel %vm85, %v68, 0
  %v117 = vsel %vm85, %v69, 0
  %v120 = vsel %vm85, %v70, 0
  %v123 = vsel %vm85, %v71, 0
  %v126 = vsel %vm85, %v72, 0
  %v129 = vsel %vm85, %v73, 0
  %v132 = vsel %vm85, %v74, 0
  %134 = vmatpush.bf16.msra.mxu0 0
  %135 = vmatpush.bf16.msra.mxu0 0
  %136 = vmatpush.bf16.msra.mxu0 0
  %137 = vmatpush.bf16.msra.mxu0 0
  %138 = vmatpush.bf16.msra.mxu0 0
  %139 = vmatpush.bf16.msra.mxu0 0
  %140 = vmatpush.bf16.msra.mxu0 %v80
  %141 = vmatpush.bf16.msra.mxu0 %v79
  %142 = vmatmul.bf16.gmra.mxu0 %v87
  %v143 = vpop.f32.mrf.mxu0
  %v144 = vadd.f32 %v83, %v143
  %v145 = vpop.f32.mrf.mxu0
  %v146 = vadd.f32 %v83, %v145
  %147 = vmatmul.bf16.gmra.mxu0 %v90
  %v148 = vpop.f32.mrf.mxu0
  %v149 = vadd.f32 %v83, %v148
  %v150 = vpop.f32.mrf.mxu0
  %v151 = vadd.f32 %v83, %v150
  %152 = vmatmul.bf16.gmra.mxu0 %v93
  %v153 = vpop.f32.mrf.mxu0
  %v154 = vadd.f32 %v83, %v153
  %v155 = vpop.f32.mrf.mxu0
  %v156 = vadd.f32 %v83, %v155
  %157 = vmatmul.bf16.gmra.mxu0 %v96
  %v158 = vpop.f32.mrf.mxu0
  %v159 = vadd.f32 %v83, %v158
  %v160 = vpop.f32.mrf.mxu0
  %v161 = vadd.f32 %v83, %v160
  %162 = vmatmul.bf16.gmra.mxu0 %v99
  %v163 = vpop.f32.mrf.mxu0
  %v164 = vadd.f32 %v83, %v163
  %v165 = vpop.f32.mrf.mxu0
  %v166 = vadd.f32 %v83, %v165
  %167 = vmatmul.bf16.gmra.mxu0 %v102
  %v168 = vpop.f32.mrf.mxu0
  %v169 = vadd.f32 %v83, %v168
  %v170 = vpop.f32.mrf.mxu0
  %v171 = vadd.f32 %v83, %v170
  %172 = vmatmul.bf16.gmra.mxu0 %v105
  %v173 = vpop.f32.mrf.mxu0
  %v174 = vadd.f32 %v83, %v173
  %v175 = vpop.f32.mrf.mxu0
  %v176 = vadd.f32 %v83, %v175
  %177 = vmatmul.bf16.gmra.mxu0 %v108
  %v178 = vpop.f32.mrf.mxu0
  %v179 = vadd.f32 %v83, %v178
  %v180 = vpop.f32.mrf.mxu0
  %v181 = vadd.f32 %v83, %v180
  %182 = vmatmul.bf16.gmra.mxu0 %v111
  %v183 = vpop.f32.mrf.mxu0
  %v184 = vadd.f32 %v83, %v183
  %v185 = vpop.f32.mrf.mxu0
  %v186 = vadd.f32 %v83, %v185
  %187 = vmatmul.bf16.gmra.mxu0 %v114
  %v188 = vpop.f32.mrf.mxu0
  %v189 = vadd.f32 %v83, %v188
  %v190 = vpop.f32.mrf.mxu0
  %v191 = vadd.f32 %v83, %v190
  %192 = vmatmul.bf16.gmra.mxu0 %v117
  %v193 = vpop.f32.mrf.mxu0
  %v194 = vadd.f32 %v83, %v193
  %v195 = vpop.f32.mrf.mxu0
  %v196 = vadd.f32 %v83, %v195
  %197 = vmatmul.bf16.gmra.mxu0 %v120
  %v198 = vpop.f32.mrf.mxu0
  %v199 = vadd.f32 %v83, %v198
  %v200 = vpop.f32.mrf.mxu0
  %v201 = vadd.f32 %v83, %v200
  %202 = vmatmul.bf16.gmra.mxu0 %v123
  %v203 = vpop.f32.mrf.mxu0
  %v204 = vadd.f32 %v83, %v203
  %v205 = vpop.f32.mrf.mxu0
  %v206 = vadd.f32 %v83, %v205
  %207 = vmatmul.bf16.gmra.mxu0 %v126
  %v208 = vpop.f32.mrf.mxu0
  %v209 = vadd.f32 %v83, %v208
  %v210 = vpop.f32.mrf.mxu0
  %v211 = vadd.f32 %v83, %v210
  %212 = vmatmul.bf16.gmra.mxu0 %v129
  %v213 = vpop.f32.mrf.mxu0
  %v214 = vadd.f32 %v83, %v213
  %v215 = vpop.f32.mrf.mxu0
  %v216 = vadd.f32 %v83, %v215
  %217 = vmatmul.bf16.gmra.mxu0 %v132
  %v218 = vpop.f32.mrf.mxu0
  %v219 = vadd.f32 %v83, %v218
  %v220 = vpop.f32.mrf.mxu0
  %v221 = vadd.f32 %v83, %v220
  %222 = vdwg.mxu0
  %v223 = vmax.f32 %v144, 0.0
  %v224 = vmax.f32 %v146, 0.0
  %v225 = vmax.f32 %v149, 0.0
  %v226 = vmax.f32 %v151, 0.0
  %v227 = vmax.f32 %v154, 0.0
  %v228 = vmax.f32 %v156, 0.0
  %v229 = vmax.f32 %v159, 0.0
  %v230 = vmax.f32 %v161, 0.0
  %v231 = vmax.f32 %v164, 0.0
  %v232 = vmax.f32 %v166, 0.0
  %v233 = vmax.f32 %v169, 0.0
  %v234 = vmax.f32 %v171, 0.0
  %v235 = vmax.f32 %v174, 0.0
  %v236 = vmax.f32 %v176, 0.0
  %v237 = vmax.f32 %v179, 0.0
  %v238 = vmax.f32 %v181, 0.0
  %v239 = vmax.f32 %v184, 0.0
  %v240 = vmax.f32 %v186, 0.0
  %v241 = vmax.f32 %v189, 0.0
  %v242 = vmax.f32 %v191, 0.0
  %v243 = vmax.f32 %v194, 0.0
  %v244 = vmax.f32 %v196, 0.0
  %v245 = vmax.f32 %v199, 0.0
  %v246 = vmax.f32 %v201, 0.0
  %v247 = vmax.f32 %v204, 0.0
  %v248 = vmax.f32 %v206, 0.0
  %v249 = vmax.f32 %v209, 0.0
  %v250 = vmax.f32 %v211, 0.0
  %v251 = vmax.f32 %v214, 0.0
  %v252 = vmax.f32 %v216, 0.0
  %v253 = vmax.f32 %v219, 0.0
  %v254 = vmax.f32 %v221, 0.0
  %v255 = vand.u32 2147483647, %v144
  %v256 = vand.u32 2147483647, %v146
  %v257 = vand.u32 2147483647, %v149
  %v258 = vand.u32 2147483647, %v151
  %v259 = vand.u32 2147483647, %v154
  %v260 = vand.u32 2147483647, %v156
  %v261 = vand.u32 2147483647, %v159
  %v262 = vand.u32 2147483647, %v161
  %v263 = vand.u32 2147483647, %v164
  %v264 = vand.u32 2147483647, %v166
  %v265 = vand.u32 2147483647, %v169
  %v266 = vand.u32 2147483647, %v171
  %v267 = vand.u32 2147483647, %v174
  %v268 = vand.u32 2147483647, %v176
  %v269 = vand.u32 2147483647, %v179
  %v270 = vand.u32 2147483647, %v181
  %v271 = vand.u32 2147483647, %v184
  %v272 = vand.u32 2147483647, %v186
  %v273 = vand.u32 2147483647, %v189
  %v274 = vand.u32 2147483647, %v191
  %v275 = vand.u32 2147483647, %v194
  %v276 = vand.u32 2147483647, %v196
  %v277 = vand.u32 2147483647, %v199
  %v278 = vand.u32 2147483647, %v201
  %v279 = vand.u32 2147483647, %v204
  %v280 = vand.u32 2147483647, %v206
  %v281 = vand.u32 2147483647, %v209
  %v282 = vand.u32 2147483647, %v211
  %v283 = vand.u32 2147483647, %v214
  %v284 = vand.u32 2147483647, %v216
  %v285 = vand.u32 2147483647, %v219
  %v286 = vand.u32 2147483647, %v221
  %v287 = vsub.f32 0.0, %v255
  %v288 = vsub.f32 0.0, %v256
  %v289 = vsub.f32 0.0, %v257
  %v290 = vsub.f32 0.0, %v258
  %v291 = vsub.f32 0.0, %v259
  %v292 = vsub.f32 0.0, %v260
  %v293 = vsub.f32 0.0, %v261
  %v294 = vsub.f32 0.0, %v262
  %v295 = vsub.f32 0.0, %v263
  %v296 = vsub.f32 0.0, %v264
  %v297 = vsub.f32 0.0, %v265
  %v298 = vsub.f32 0.0, %v266
  %v299 = vsub.f32 0.0, %v267
  %v300 = vsub.f32 0.0, %v268
  %v301 = vsub.f32 0.0, %v269
  %v302 = vsub.f32 0.0, %v270
  %v303 = vsub.f32 0.0, %v271
  %v304 = vsub.f32 0.0, %v272
  %v305 = vsub.f32 0.0, %v273
  %v306 = vsub.f32 0.0, %v274
  %v307 = vsub.f32 0.0, %v275
  %v308 = vsub.f32 0.0, %v276
  %v309 = vsub.f32 0.0, %v277
  %v310 = vsub.f32 0.0, %v278
  %v311 = vsub.f32 0.0, %v279
  %v312 = vsub.f32 0.0, %v280
  %v313 = vsub.f32 0.0, %v281
  %v314 = vsub.f32 0.0, %v282
  %v315 = vsub.f32 0.0, %v283
  %v316 = vsub.f32 0.0, %v284
  %v317 = vsub.f32 0.0, %v285
  %v318 = vsub.f32 0.0, %v286
  %v319 = vmul.f32 %v287, 1.442695
  %v320 = vpow.pop %v319
  %v321 = vmul.f32 %v288, 1.442695
  %v322 = vpow.pop %v321
  %v323 = vmul.f32 %v289, 1.442695
  %v324 = vpow.pop %v323
  %v325 = vmul.f32 %v290, 1.442695
  %v326 = vpow.pop %v325
  %v327 = vmul.f32 %v291, 1.442695
  %v328 = vpow.pop %v327
  %v329 = vmul.f32 %v292, 1.442695
  %v330 = vpow.pop %v329
  %v331 = vmul.f32 %v293, 1.442695
  %v332 = vpow.pop %v331
  %v333 = vmul.f32 %v294, 1.442695
  %v334 = vpow.pop %v333
  %v335 = vmul.f32 %v295, 1.442695
  %v336 = vpow.pop %v335
  %v337 = vmul.f32 %v296, 1.442695
  %v338 = vpow.pop %v337
  %v339 = vmul.f32 %v297, 1.442695
  %v340 = vpow.pop %v339
  %v341 = vmul.f32 %v298, 1.442695
  %v342 = vpow.pop %v341
  %v343 = vmul.f32 %v299, 1.442695
  %v344 = vpow.pop %v343
  %v345 = vmul.f32 %v300, 1.442695
  %v346 = vpow.pop %v345
  %v347 = vmul.f32 %v301, 1.442695
  %v348 = vpow.pop %v347
  %v349 = vmul.f32 %v302, 1.442695
  %v350 = vpow.pop %v349
  %v351 = vmul.f32 %v303, 1.442695
  %v352 = vpow.pop %v351
  %v353 = vmul.f32 %v304, 1.442695
  %v354 = vpow.pop %v353
  %v355 = vmul.f32 %v305, 1.442695
  %v356 = vpow.pop %v355
  %v357 = vmul.f32 %v306, 1.442695
  %v358 = vpow.pop %v357
  %v359 = vmul.f32 %v307, 1.442695
  %v360 = vpow.pop %v359
  %v361 = vmul.f32 %v308, 1.442695
  %v362 = vpow.pop %v361
  %v363 = vmul.f32 %v309, 1.442695
  %v364 = vpow.pop %v363
  %v365 = vmul.f32 %v310, 1.442695
  %v366 = vpow.pop %v365
  %v367 = vmul.f32 %v311, 1.442695
  %v368 = vpow.pop %v367
  %v369 = vmul.f32 %v312, 1.442695
  %v370 = vpow.pop %v369
  %v371 = vmul.f32 %v313, 1.442695
  %v372 = vpow.pop %v371
  %v373 = vmul.f32 %v314, 1.442695
  %v374 = vpow.pop %v373
  %v375 = vmul.f32 %v315, 1.442695
  %v376 = vpow.pop %v375
  %v377 = vmul.f32 %v316, 1.442695
  %v378 = vpow.pop %v377
  %v379 = vmul.f32 %v317, 1.442695
  %v380 = vpow.pop %v379
  %v381 = vmul.f32 %v318, 1.442695
  %v382 = vpow.pop %v381
  %v383 = vadd.f32 %v320, 1.0
  %v384 = vadd.f32 %v322, 1.0
  %v385 = vadd.f32 %v324, 1.0
  %v386 = vadd.f32 %v326, 1.0
  %v387 = vadd.f32 %v328, 1.0
  %v388 = vadd.f32 %v330, 1.0
  %v389 = vadd.f32 %v332, 1.0
  %v390 = vadd.f32 %v334, 1.0
  %v391 = vadd.f32 %v336, 1.0
  %v392 = vadd.f32 %v338, 1.0
  %v393 = vadd.f32 %v340, 1.0
  %v394 = vadd.f32 %v342, 1.0
  %v395 = vadd.f32 %v344, 1.0
  %v396 = vadd.f32 %v346, 1.0
  %v397 = vadd.f32 %v348, 1.0
  %v398 = vadd.f32 %v350, 1.0
  %v399 = vadd.f32 %v352, 1.0
  %v400 = vadd.f32 %v354, 1.0
  %v401 = vadd.f32 %v356, 1.0
  %v402 = vadd.f32 %v358, 1.0
  %v403 = vadd.f32 %v360, 1.0
  %v404 = vadd.f32 %v362, 1.0
  %v405 = vadd.f32 %v364, 1.0
  %v406 = vadd.f32 %v366, 1.0
  %v407 = vadd.f32 %v368, 1.0
  %v408 = vadd.f32 %v370, 1.0
  %v409 = vadd.f32 %v372, 1.0
  %v410 = vadd.f32 %v374, 1.0
  %v411 = vadd.f32 %v376, 1.0
  %v412 = vadd.f32 %v378, 1.0
  %v413 = vadd.f32 %v380, 1.0
  %v414 = vadd.f32 %v382, 1.0
  %v415 = vlog2.pop %v383
  %v416 = vmul.f32 %v415, 0.6931472
  %v417 = vlog2.pop %v384
  %v418 = vmul.f32 %v417, 0.6931472
  %v419 = vlog2.pop %v385
  %v420 = vmul.f32 %v419, 0.6931472
  %v421 = vlog2.pop %v386
  %v422 = vmul.f32 %v421, 0.6931472
  %v423 = vlog2.pop %v387
  %v424 = vmul.f32 %v423, 0.6931472
  %v425 = vlog2.pop %v388
  %v426 = vmul.f32 %v425, 0.6931472
  %v427 = vlog2.pop %v389
  %v428 = vmul.f32 %v427, 0.6931472
  %v429 = vlog2.pop %v390
  %v430 = vmul.f32 %v429, 0.6931472
  %v431 = vlog2.pop %v391
  %v432 = vmul.f32 %v431, 0.6931472
  %v433 = vlog2.pop %v392
  %v434 = vmul.f32 %v433, 0.6931472
  %v435 = vlog2.pop %v393
  %v436 = vmul.f32 %v435, 0.6931472
  %v437 = vlog2.pop %v394
  %v438 = vmul.f32 %v437, 0.6931472
  %v439 = vlog2.pop %v395
  %v440 = vmul.f32 %v439, 0.6931472
  %v441 = vlog2.pop %v396
  %v442 = vmul.f32 %v441, 0.6931472
  %v443 = vlog2.pop %v397
  %v444 = vmul.f32 %v443, 0.6931472
  %v445 = vlog2.pop %v398
  %v446 = vmul.f32 %v445, 0.6931472
  %v447 = vlog2.pop %v399
  %v448 = vmul.f32 %v447, 0.6931472
  %v449 = vlog2.pop %v400
  %v450 = vmul.f32 %v449, 0.6931472
  %v451 = vlog2.pop %v401
  %v452 = vmul.f32 %v451, 0.6931472
  %v453 = vlog2.pop %v402
  %v454 = vmul.f32 %v453, 0.6931472
  %v455 = vlog2.pop %v403
  %v456 = vmul.f32 %v455, 0.6931472
  %v457 = vlog2.pop %v404
  %v458 = vmul.f32 %v457, 0.6931472
  %v459 = vlog2.pop %v405
  %v460 = vmul.f32 %v459, 0.6931472
  %v461 = vlog2.pop %v406
  %v462 = vmul.f32 %v461, 0.6931472
  %v463 = vlog2.pop %v407
  %v464 = vmul.f32 %v463, 0.6931472
  %v465 = vlog2.pop %v408
  %v466 = vmul.f32 %v465, 0.6931472
  %v467 = vlog2.pop %v409
  %v468 = vmul.f32 %v467, 0.6931472
  %v469 = vlog2.pop %v410
  %v470 = vmul.f32 %v469, 0.6931472
  %v471 = vlog2.pop %v411
  %v472 = vmul.f32 %v471, 0.6931472
  %v473 = vlog2.pop %v412
  %v474 = vmul.f32 %v473, 0.6931472
  %v475 = vlog2.pop %v413
  %v476 = vmul.f32 %v475, 0.6931472
  %v477 = vlog2.pop %v414
  %v478 = vmul.f32 %v477, 0.6931472
  %v479 = vadd.f32 %v223, %v416
  %v480 = vadd.f32 %v224, %v418
  %v481 = vadd.f32 %v225, %v420
  %v482 = vadd.f32 %v226, %v422
  %v483 = vadd.f32 %v227, %v424
  %v484 = vadd.f32 %v228, %v426
  %v485 = vadd.f32 %v229, %v428
  %v486 = vadd.f32 %v230, %v430
  %v487 = vadd.f32 %v231, %v432
  %v488 = vadd.f32 %v232, %v434
  %v489 = vadd.f32 %v233, %v436
  %v490 = vadd.f32 %v234, %v438
  %v491 = vadd.f32 %v235, %v440
  %v492 = vadd.f32 %v236, %v442
  %v493 = vadd.f32 %v237, %v444
  %v494 = vadd.f32 %v238, %v446
  %v495 = vadd.f32 %v239, %v448
  %v496 = vadd.f32 %v240, %v450
  %v497 = vadd.f32 %v241, %v452
  %v498 = vadd.f32 %v242, %v454
  %v499 = vadd.f32 %v243, %v456
  %v500 = vadd.f32 %v244, %v458
  %v501 = vadd.f32 %v245, %v460
  %v502 = vadd.f32 %v246, %v462
  %v503 = vadd.f32 %v247, %v464
  %v504 = vadd.f32 %v248, %v466
  %v505 = vadd.f32 %v249, %v468
  %v506 = vadd.f32 %v250, %v470
  %v507 = vadd.f32 %v251, %v472
  %v508 = vadd.f32 %v252, %v474
  %v509 = vadd.f32 %v253, %v476
  %v510 = vadd.f32 %v254, %v478
  %v511 = vtanh.pop %v479
  %v512 = vtanh.pop %v480
  %v513 = vtanh.pop %v481
  %v514 = vtanh.pop %v482
  %v515 = vtanh.pop %v483
  %v516 = vtanh.pop %v484
  %v517 = vtanh.pop %v485
  %v518 = vtanh.pop %v486
  %v519 = vtanh.pop %v487
  %v520 = vtanh.pop %v488
  %v521 = vtanh.pop %v489
  %v522 = vtanh.pop %v490
  %v523 = vtanh.pop %v491
  %v524 = vtanh.pop %v492
  %v525 = vtanh.pop %v493
  %v526 = vtanh.pop %v494
  %v527 = vtanh.pop %v495
  %v528 = vtanh.pop %v496
  %v529 = vtanh.pop %v497
  %v530 = vtanh.pop %v498
  %v531 = vtanh.pop %v499
  %v532 = vtanh.pop %v500
  %v533 = vtanh.pop %v501
  %v534 = vtanh.pop %v502
  %v535 = vtanh.pop %v503
  %v536 = vtanh.pop %v504
  %v537 = vtanh.pop %v505
  %v538 = vtanh.pop %v506
  %v539 = vtanh.pop %v507
  %v540 = vtanh.pop %v508
  %v541 = vtanh.pop %v509
  %v542 = vtanh.pop %v510
  %v543 = vmul.f32 %v144, %v511
  %v544 = vmul.f32 %v146, %v512
  %v545 = vmul.f32 %v149, %v513
  %v546 = vmul.f32 %v151, %v514
  %v547 = vmul.f32 %v154, %v515
  %v548 = vmul.f32 %v156, %v516
  %v549 = vmul.f32 %v159, %v517
  %v550 = vmul.f32 %v161, %v518
  %v551 = vmul.f32 %v164, %v519
  %v552 = vmul.f32 %v166, %v520
  %v553 = vmul.f32 %v169, %v521
  %v554 = vmul.f32 %v171, %v522
  %v555 = vmul.f32 %v174, %v523
  %v556 = vmul.f32 %v176, %v524
  %v557 = vmul.f32 %v179, %v525
  %v558 = vmul.f32 %v181, %v526
  %v559 = vmul.f32 %v184, %v527
  %v560 = vmul.f32 %v186, %v528
  %v561 = vmul.f32 %v189, %v529
  %v562 = vmul.f32 %v191, %v530
  %v563 = vmul.f32 %v194, %v531
  %v564 = vmul.f32 %v196, %v532
  %v565 = vmul.f32 %v199, %v533
  %v566 = vmul.f32 %v201, %v534
  %v567 = vmul.f32 %v204, %v535
  %v568 = vmul.f32 %v206, %v536
  %v569 = vmul.f32 %v209, %v537
  %v570 = vmul.f32 %v211, %v538
  %v571 = vmul.f32 %v214, %v539
  %v572 = vmul.f32 %v216, %v540
  %v573 = vmul.f32 %v219, %v541
  %v574 = vmul.f32 %v221, %v542
  %v575 = vpack.c.bf16 %v544, %v543
  %v576 = vpack.c.bf16 %v546, %v545
  %v577 = vpack.c.bf16 %v548, %v547
  %v578 = vpack.c.bf16 %v550, %v549
  %v579 = vpack.c.bf16 %v552, %v551
  %v580 = vpack.c.bf16 %v554, %v553
  %v581 = vpack.c.bf16 %v556, %v555
  %v582 = vpack.c.bf16 %v558, %v557
  %v583 = vpack.c.bf16 %v560, %v559
  %v584 = vpack.c.bf16 %v562, %v561
  %v585 = vpack.c.bf16 %v564, %v563
  %v586 = vpack.c.bf16 %v566, %v565
  %v587 = vpack.c.bf16 %v568, %v567
  %v588 = vpack.c.bf16 %v570, %v569
  %v589 = vpack.c.bf16 %v572, %v571
  %v590 = vpack.c.bf16 %v574, %v573
  %v591 = vld [vmem:[%s3] sm:$0xff]
  %v592 = vld [vmem:[%s3 + $0x8] sm:$0xff]
  %v593 = vld [vmem:[%s3 + $0x10] sm:$0xff]
  %v594 = vld [vmem:[%s3 + $0x18] sm:$0xff]
  %v595 = vld [vmem:[%s3 + $0x20] sm:$0xff]
  %v596 = vld [vmem:[%s3 + $0x28] sm:$0xff]
  %v597 = vld [vmem:[%s3 + $0x30] sm:$0xff]
  %v598 = vld [vmem:[%s3 + $0x38] sm:$0xff]
  %v599 = vpack.c.bf16 %v592, %v591
  %v600 = vpack.c.bf16 %v594, %v593
  %v601 = vpack.c.bf16 %v596, %v595
  %v602 = vpack.c.bf16 %v598, %v597
  %v603 = vld [vmem:[%s4] sm:$0x1]
  %v605 = vperm.slane %v603, 0
  %vm607 = vcmask 523264
  %v609 = vsel %vm607, %v575, 0
  %v612 = vsel %vm607, %v576, 0
  %v615 = vsel %vm607, %v577, 0
  %v618 = vsel %vm607, %v578, 0
  %v621 = vsel %vm607, %v579, 0
  %v624 = vsel %vm607, %v580, 0
  %v627 = vsel %vm607, %v581, 0
  %v630 = vsel %vm607, %v582, 0
  %v633 = vsel %vm607, %v583, 0
  %v636 = vsel %vm607, %v584, 0
  %v639 = vsel %vm607, %v585, 0
  %v642 = vsel %vm607, %v586, 0
  %v645 = vsel %vm607, %v587, 0
  %v648 = vsel %vm607, %v588, 0
  %v651 = vsel %vm607, %v589, 0
  %v654 = vsel %vm607, %v590, 0
  %656 = vmatpush.bf16.msra.mxu0 0
  %657 = vmatpush.bf16.msra.mxu0 0
  %658 = vmatpush.bf16.msra.mxu0 0
  %659 = vmatpush.bf16.msra.mxu0 0
  %660 = vmatpush.bf16.msra.mxu0 %v602
  %661 = vmatpush.bf16.msra.mxu0 %v601
  %662 = vmatpush.bf16.msra.mxu0 %v600
  %663 = vmatpush.bf16.msra.mxu0 %v599
  %664 = vmatmul.bf16.gmra.mxu0 %v609
  %v665 = vpop.f32.mrf.mxu0
  %v666 = vadd.f32 %v605, %v665
  %v667 = vpop.f32.mrf.mxu0
  %v668 = vadd.f32 %v605, %v667
  %669 = vmatmul.bf16.gmra.mxu0 %v612
  %v670 = vpop.f32.mrf.mxu0
  %v671 = vadd.f32 %v605, %v670
  %v672 = vpop.f32.mrf.mxu0
  %v673 = vadd.f32 %v605, %v672
  %674 = vmatmul.bf16.gmra.mxu0 %v615
  %v675 = vpop.f32.mrf.mxu0
  %v676 = vadd.f32 %v605, %v675
  %v677 = vpop.f32.mrf.mxu0
  %v678 = vadd.f32 %v605, %v677
  %679 = vmatmul.bf16.gmra.mxu0 %v618
  %v680 = vpop.f32.mrf.mxu0
  %v681 = vadd.f32 %v605, %v680
  %v682 = vpop.f32.mrf.mxu0
  %v683 = vadd.f32 %v605, %v682
  %684 = vmatmul.bf16.gmra.mxu0 %v621
  %v685 = vpop.f32.mrf.mxu0
  %v686 = vadd.f32 %v605, %v685
  %v687 = vpop.f32.mrf.mxu0
  %v688 = vadd.f32 %v605, %v687
  %689 = vmatmul.bf16.gmra.mxu0 %v624
  %v690 = vpop.f32.mrf.mxu0
  %v691 = vadd.f32 %v605, %v690
  %v692 = vpop.f32.mrf.mxu0
  %v693 = vadd.f32 %v605, %v692
  %694 = vmatmul.bf16.gmra.mxu0 %v627
  %v695 = vpop.f32.mrf.mxu0
  %v696 = vadd.f32 %v605, %v695
  %v697 = vpop.f32.mrf.mxu0
  %v698 = vadd.f32 %v605, %v697
  %699 = vmatmul.bf16.gmra.mxu0 %v630
  %v700 = vpop.f32.mrf.mxu0
  %v701 = vadd.f32 %v605, %v700
  %v702 = vpop.f32.mrf.mxu0
  %v703 = vadd.f32 %v605, %v702
  %704 = vmatmul.bf16.gmra.mxu0 %v633
  %v705 = vpop.f32.mrf.mxu0
  %v706 = vadd.f32 %v605, %v705
  %v707 = vpop.f32.mrf.mxu0
  %v708 = vadd.f32 %v605, %v707
  %709 = vmatmul.bf16.gmra.mxu0 %v636
  %v710 = vpop.f32.mrf.mxu0
  %v711 = vadd.f32 %v605, %v710
  %v712 = vpop.f32.mrf.mxu0
  %v713 = vadd.f32 %v605, %v712
  %714 = vmatmul.bf16.gmra.mxu0 %v639
  %v715 = vpop.f32.mrf.mxu0
  %v716 = vadd.f32 %v605, %v715
  %v717 = vpop.f32.mrf.mxu0
  %v718 = vadd.f32 %v605, %v717
  %719 = vmatmul.bf16.gmra.mxu0 %v642
  %v720 = vpop.f32.mrf.mxu0
  %v721 = vadd.f32 %v605, %v720
  %v722 = vpop.f32.mrf.mxu0
  %v723 = vadd.f32 %v605, %v722
  %724 = vmatmul.bf16.gmra.mxu0 %v645
  %v725 = vpop.f32.mrf.mxu0
  %v726 = vadd.f32 %v605, %v725
  %v727 = vpop.f32.mrf.mxu0
  %v728 = vadd.f32 %v605, %v727
  %729 = vmatmul.bf16.gmra.mxu0 %v648
  %v730 = vpop.f32.mrf.mxu0
  %v731 = vadd.f32 %v605, %v730
  %v732 = vpop.f32.mrf.mxu0
  %v733 = vadd.f32 %v605, %v732
  %734 = vmatmul.bf16.gmra.mxu0 %v651
  %v735 = vpop.f32.mrf.mxu0
  %v736 = vadd.f32 %v605, %v735
  %v737 = vpop.f32.mrf.mxu0
  %v738 = vadd.f32 %v605, %v737
  %739 = vmatmul.bf16.gmra.mxu0 %v654
  %v740 = vpop.f32.mrf.mxu0
  %v741 = vadd.f32 %v605, %v740
  %v742 = vpop.f32.mrf.mxu0
  %v743 = vadd.f32 %v605, %v742
  %744 = vdwg.mxu0
  %v745 = vmax.f32 %v666, 0.0
  %v746 = vmax.f32 %v668, 0.0
  %v747 = vmax.f32 %v671, 0.0
  %v748 = vmax.f32 %v673, 0.0
  %v749 = vmax.f32 %v676, 0.0
  %v750 = vmax.f32 %v678, 0.0
  %v751 = vmax.f32 %v681, 0.0
  %v752 = vmax.f32 %v683, 0.0
  %v753 = vmax.f32 %v686, 0.0
  %v754 = vmax.f32 %v688, 0.0
  %v755 = vmax.f32 %v691, 0.0
  %v756 = vmax.f32 %v693, 0.0
  %v757 = vmax.f32 %v696, 0.0
  %v758 = vmax.f32 %v698, 0.0
  %v759 = vmax.f32 %v701, 0.0
  %v760 = vmax.f32 %v703, 0.0
  %v761 = vmax.f32 %v706, 0.0
  %v762 = vmax.f32 %v708, 0.0
  %v763 = vmax.f32 %v711, 0.0
  %v764 = vmax.f32 %v713, 0.0
  %v765 = vmax.f32 %v716, 0.0
  %v766 = vmax.f32 %v718, 0.0
  %v767 = vmax.f32 %v721, 0.0
  %v768 = vmax.f32 %v723, 0.0
  %v769 = vmax.f32 %v726, 0.0
  %v770 = vmax.f32 %v728, 0.0
  %v771 = vmax.f32 %v731, 0.0
  %v772 = vmax.f32 %v733, 0.0
  %v773 = vmax.f32 %v736, 0.0
  %v774 = vmax.f32 %v738, 0.0
  %v775 = vmax.f32 %v741, 0.0
  %v776 = vmax.f32 %v743, 0.0
  %v777 = vand.u32 2147483647, %v666
  %v778 = vand.u32 2147483647, %v668
  %v779 = vand.u32 2147483647, %v671
  %v780 = vand.u32 2147483647, %v673
  %v781 = vand.u32 2147483647, %v676
  %v782 = vand.u32 2147483647, %v678
  %v783 = vand.u32 2147483647, %v681
  %v784 = vand.u32 2147483647, %v683
  %v785 = vand.u32 2147483647, %v686
  %v786 = vand.u32 2147483647, %v688
  %v787 = vand.u32 2147483647, %v691
  %v788 = vand.u32 2147483647, %v693
  %v789 = vand.u32 2147483647, %v696
  %v790 = vand.u32 2147483647, %v698
  %v791 = vand.u32 2147483647, %v701
  %v792 = vand.u32 2147483647, %v703
  %v793 = vand.u32 2147483647, %v706
  %v794 = vand.u32 2147483647, %v708
  %v795 = vand.u32 2147483647, %v711
  %v796 = vand.u32 2147483647, %v713
  %v797 = vand.u32 2147483647, %v716
  %v798 = vand.u32 2147483647, %v718
  %v799 = vand.u32 2147483647, %v721
  %v800 = vand.u32 2147483647, %v723
  %v801 = vand.u32 2147483647, %v726
  %v802 = vand.u32 2147483647, %v728
  %v803 = vand.u32 2147483647, %v731
  %v804 = vand.u32 2147483647, %v733
  %v805 = vand.u32 2147483647, %v736
  %v806 = vand.u32 2147483647, %v738
  %v807 = vand.u32 2147483647, %v741
  %v808 = vand.u32 2147483647, %v743
  %v809 = vsub.f32 0.0, %v777
  %v810 = vsub.f32 0.0, %v778
  %v811 = vsub.f32 0.0, %v779
  %v812 = vsub.f32 0.0, %v780
  %v813 = vsub.f32 0.0, %v781
  %v814 = vsub.f32 0.0, %v782
  %v815 = vsub.f32 0.0, %v783
  %v816 = vsub.f32 0.0, %v784
  %v817 = vsub.f32 0.0, %v785
  %v818 = vsub.f32 0.0, %v786
  %v819 = vsub.f32 0.0, %v787
  %v820 = vsub.f32 0.0, %v788
  %v821 = vsub.f32 0.0, %v789
  %v822 = vsub.f32 0.0, %v790
  %v823 = vsub.f32 0.0, %v791
  %v824 = vsub.f32 0.0, %v792
  %v825 = vsub.f32 0.0, %v793
  %v826 = vsub.f32 0.0, %v794
  %v827 = vsub.f32 0.0, %v795
  %v828 = vsub.f32 0.0, %v796
  %v829 = vsub.f32 0.0, %v797
  %v830 = vsub.f32 0.0, %v798
  %v831 = vsub.f32 0.0, %v799
  %v832 = vsub.f32 0.0, %v800
  %v833 = vsub.f32 0.0, %v801
  %v834 = vsub.f32 0.0, %v802
  %v835 = vsub.f32 0.0, %v803
  %v836 = vsub.f32 0.0, %v804
  %v837 = vsub.f32 0.0, %v805
  %v838 = vsub.f32 0.0, %v806
  %v839 = vsub.f32 0.0, %v807
  %v840 = vsub.f32 0.0, %v808
  %v841 = vmul.f32 %v809, 1.442695
  %v842 = vpow.pop %v841
  %v843 = vmul.f32 %v810, 1.442695
  %v844 = vpow.pop %v843
  %v845 = vmul.f32 %v811, 1.442695
  %v846 = vpow.pop %v845
  %v847 = vmul.f32 %v812, 1.442695
  %v848 = vpow.pop %v847
  %v849 = vmul.f32 %v813, 1.442695
  %v850 = vpow.pop %v849
  %v851 = vmul.f32 %v814, 1.442695
  %v852 = vpow.pop %v851
  %v853 = vmul.f32 %v815, 1.442695
  %v854 = vpow.pop %v853
  %v855 = vmul.f32 %v816, 1.442695
  %v856 = vpow.pop %v855
  %v857 = vmul.f32 %v817, 1.442695
  %v858 = vpow.pop %v857
  %v859 = vmul.f32 %v818, 1.442695
  %v860 = vpow.pop %v859
  %v861 = vmul.f32 %v819, 1.442695
  %v862 = vpow.pop %v861
  %v863 = vmul.f32 %v820, 1.442695
  %v864 = vpow.pop %v863
  %v865 = vmul.f32 %v821, 1.442695
  %v866 = vpow.pop %v865
  %v867 = vmul.f32 %v822, 1.442695
  %v868 = vpow.pop %v867
  %v869 = vmul.f32 %v823, 1.442695
  %v870 = vpow.pop %v869
  %v871 = vmul.f32 %v824, 1.442695
  %v872 = vpow.pop %v871
  %v873 = vmul.f32 %v825, 1.442695
  %v874 = vpow.pop %v873
  %v875 = vmul.f32 %v826, 1.442695
  %v876 = vpow.pop %v875
  %v877 = vmul.f32 %v827, 1.442695
  %v878 = vpow.pop %v877
  %v879 = vmul.f32 %v828, 1.442695
  %v880 = vpow.pop %v879
  %v881 = vmul.f32 %v829, 1.442695
  %v882 = vpow.pop %v881
  %v883 = vmul.f32 %v830, 1.442695
  %v884 = vpow.pop %v883
  %v885 = vmul.f32 %v831, 1.442695
  %v886 = vpow.pop %v885
  %v887 = vmul.f32 %v832, 1.442695
  %v888 = vpow.pop %v887
  %v889 = vmul.f32 %v833, 1.442695
  %v890 = vpow.pop %v889
  %v891 = vmul.f32 %v834, 1.442695
  %v892 = vpow.pop %v891
  %v893 = vmul.f32 %v835, 1.442695
  %v894 = vpow.pop %v893
  %v895 = vmul.f32 %v836, 1.442695
  %v896 = vpow.pop %v895
  %v897 = vmul.f32 %v837, 1.442695
  %v898 = vpow.pop %v897
  %v899 = vmul.f32 %v838, 1.442695
  %v900 = vpow.pop %v899
  %v901 = vmul.f32 %v839, 1.442695
  %v902 = vpow.pop %v901
  %v903 = vmul.f32 %v840, 1.442695
  %v904 = vpow.pop %v903
  %v905 = vadd.f32 %v842, 1.0
  %v906 = vadd.f32 %v844, 1.0
  %v907 = vadd.f32 %v846, 1.0
  %v908 = vadd.f32 %v848, 1.0
  %v909 = vadd.f32 %v850, 1.0
  %v910 = vadd.f32 %v852, 1.0
  %v911 = vadd.f32 %v854, 1.0
  %v912 = vadd.f32 %v856, 1.0
  %v913 = vadd.f32 %v858, 1.0
  %v914 = vadd.f32 %v860, 1.0
  %v915 = vadd.f32 %v862, 1.0
  %v916 = vadd.f32 %v864, 1.0
  %v917 = vadd.f32 %v866, 1.0
  %v918 = vadd.f32 %v868, 1.0
  %v919 = vadd.f32 %v870, 1.0
  %v920 = vadd.f32 %v872, 1.0
  %v921 = vadd.f32 %v874, 1.0
  %v922 = vadd.f32 %v876, 1.0
  %v923 = vadd.f32 %v878, 1.0
  %v924 = vadd.f32 %v880, 1.0
  %v925 = vadd.f32 %v882, 1.0
  %v926 = vadd.f32 %v884, 1.0
  %v927 = vadd.f32 %v886, 1.0
  %v928 = vadd.f32 %v888, 1.0
  %v929 = vadd.f32 %v890, 1.0
  %v930 = vadd.f32 %v892, 1.0
  %v931 = vadd.f32 %v894, 1.0
  %v932 = vadd.f32 %v896, 1.0
  %v933 = vadd.f32 %v898, 1.0
  %v934 = vadd.f32 %v900, 1.0
  %v935 = vadd.f32 %v902, 1.0
  %v936 = vadd.f32 %v904, 1.0
  %v937 = vlog2.pop %v905
  %v938 = vmul.f32 %v937, 0.6931472
  %v939 = vlog2.pop %v906
  %v940 = vmul.f32 %v939, 0.6931472
  %v941 = vlog2.pop %v907
  %v942 = vmul.f32 %v941, 0.6931472
  %v943 = vlog2.pop %v908
  %v944 = vmul.f32 %v943, 0.6931472
  %v945 = vlog2.pop %v909
  %v946 = vmul.f32 %v945, 0.6931472
  %v947 = vlog2.pop %v910
  %v948 = vmul.f32 %v947, 0.6931472
  %v949 = vlog2.pop %v911
  %v950 = vmul.f32 %v949, 0.6931472
  %v951 = vlog2.pop %v912
  %v952 = vmul.f32 %v951, 0.6931472
  %v953 = vlog2.pop %v913
  %v954 = vmul.f32 %v953, 0.6931472
  %v955 = vlog2.pop %v914
  %v956 = vmul.f32 %v955, 0.6931472
  %v957 = vlog2.pop %v915
  %v958 = vmul.f32 %v957, 0.6931472
  %v959 = vlog2.pop %v916
  %v960 = vmul.f32 %v959, 0.6931472
  %v961 = vlog2.pop %v917
  %v962 = vmul.f32 %v961, 0.6931472
  %v963 = vlog2.pop %v918
  %v964 = vmul.f32 %v963, 0.6931472
  %v965 = vlog2.pop %v919
  %v966 = vmul.f32 %v965, 0.6931472
  %v967 = vlog2.pop %v920
  %v968 = vmul.f32 %v967, 0.6931472
  %v969 = vlog2.pop %v921
  %v970 = vmul.f32 %v969, 0.6931472
  %v971 = vlog2.pop %v922
  %v972 = vmul.f32 %v971, 0.6931472
  %v973 = vlog2.pop %v923
  %v974 = vmul.f32 %v973, 0.6931472
  %v975 = vlog2.pop %v924
  %v976 = vmul.f32 %v975, 0.6931472
  %v977 = vlog2.pop %v925
  %v978 = vmul.f32 %v977, 0.6931472
  %v979 = vlog2.pop %v926
  %v980 = vmul.f32 %v979, 0.6931472
  %v981 = vlog2.pop %v927
  %v982 = vmul.f32 %v981, 0.6931472
  %v983 = vlog2.pop %v928
  %v984 = vmul.f32 %v983, 0.6931472
  %v985 = vlog2.pop %v929
  %v986 = vmul.f32 %v985, 0.6931472
  %v987 = vlog2.pop %v930
  %v988 = vmul.f32 %v987, 0.6931472
  %v989 = vlog2.pop %v931
  %v990 = vmul.f32 %v989, 0.6931472
  %v991 = vlog2.pop %v932
  %v992 = vmul.f32 %v991, 0.6931472
  %v993 = vlog2.pop %v933
  %v994 = vmul.f32 %v993, 0.6931472
  %v995 = vlog2.pop %v934
  %v996 = vmul.f32 %v995, 0.6931472
  %v997 = vlog2.pop %v935
  %v998 = vmul.f32 %v997, 0.6931472
  %v999 = vlog2.pop %v936
  %v1000 = vmul.f32 %v999, 0.6931472
  %v1001 = vadd.f32 %v745, %v938
  %v1002 = vadd.f32 %v746, %v940
  %v1003 = vadd.f32 %v747, %v942
  %v1004 = vadd.f32 %v748, %v944
  %v1005 = vadd.f32 %v749, %v946
  %v1006 = vadd.f32 %v750, %v948
  %v1007 = vadd.f32 %v751, %v950
  %v1008 = vadd.f32 %v752, %v952
  %v1009 = vadd.f32 %v753, %v954
  %v1010 = vadd.f32 %v754, %v956
  %v1011 = vadd.f32 %v755, %v958
  %v1012 = vadd.f32 %v756, %v960
  %v1013 = vadd.f32 %v757, %v962
  %v1014 = vadd.f32 %v758, %v964
  %v1015 = vadd.f32 %v759, %v966
  %v1016 = vadd.f32 %v760, %v968
  %v1017 = vadd.f32 %v761, %v970
  %v1018 = vadd.f32 %v762, %v972
  %v1019 = vadd.f32 %v763, %v974
  %v1020 = vadd.f32 %v764, %v976
  %v1021 = vadd.f32 %v765, %v978
  %v1022 = vadd.f32 %v766, %v980
  %v1023 = vadd.f32 %v767, %v982
  %v1024 = vadd.f32 %v768, %v984
  %v1025 = vadd.f32 %v769, %v986
  %v1026 = vadd.f32 %v770, %v988
  %v1027 = vadd.f32 %v771, %v990
  %v1028 = vadd.f32 %v772, %v992
  %v1029 = vadd.f32 %v773, %v994
  %v1030 = vadd.f32 %v774, %v996
  %v1031 = vadd.f32 %v775, %v998
  %v1032 = vadd.f32 %v776, %v1000
  %v1033 = vtanh.pop %v1001
  %v1034 = vtanh.pop %v1002
  %v1035 = vtanh.pop %v1003
  %v1036 = vtanh.pop %v1004
  %v1037 = vtanh.pop %v1005
  %v1038 = vtanh.pop %v1006
  %v1039 = vtanh.pop %v1007
  %v1040 = vtanh.pop %v1008
  %v1041 = vtanh.pop %v1009
  %v1042 = vtanh.pop %v1010
  %v1043 = vtanh.pop %v1011
  %v1044 = vtanh.pop %v1012
  %v1045 = vtanh.pop %v1013
  %v1046 = vtanh.pop %v1014
  %v1047 = vtanh.pop %v1015
  %v1048 = vtanh.pop %v1016
  %v1049 = vtanh.pop %v1017
  %v1050 = vtanh.pop %v1018
  %v1051 = vtanh.pop %v1019
  %v1052 = vtanh.pop %v1020
  %v1053 = vtanh.pop %v1021
  %v1054 = vtanh.pop %v1022
  %v1055 = vtanh.pop %v1023
  %v1056 = vtanh.pop %v1024
  %v1057 = vtanh.pop %v1025
  %v1058 = vtanh.pop %v1026
  %v1059 = vtanh.pop %v1027
  %v1060 = vtanh.pop %v1028
  %v1061 = vtanh.pop %v1029
  %v1062 = vtanh.pop %v1030
  %v1063 = vtanh.pop %v1031
  %v1064 = vtanh.pop %v1032
  %v1065 = vmul.f32 %v666, %v1033
  %v1066 = vmul.f32 %v668, %v1034
  %v1067 = vmul.f32 %v671, %v1035
  %v1068 = vmul.f32 %v673, %v1036
  %v1069 = vmul.f32 %v676, %v1037
  %v1070 = vmul.f32 %v678, %v1038
  %v1071 = vmul.f32 %v681, %v1039
  %v1072 = vmul.f32 %v683, %v1040
  %v1073 = vmul.f32 %v686, %v1041
  %v1074 = vmul.f32 %v688, %v1042
  %v1075 = vmul.f32 %v691, %v1043
  %v1076 = vmul.f32 %v693, %v1044
  %v1077 = vmul.f32 %v696, %v1045
  %v1078 = vmul.f32 %v698, %v1046
  %v1079 = vmul.f32 %v701, %v1047
  %v1080 = vmul.f32 %v703, %v1048
  %v1081 = vmul.f32 %v706, %v1049
  %v1082 = vmul.f32 %v708, %v1050
  %v1083 = vmul.f32 %v711, %v1051
  %v1084 = vmul.f32 %v713, %v1052
  %v1085 = vmul.f32 %v716, %v1053
  %v1086 = vmul.f32 %v718, %v1054
  %v1087 = vmul.f32 %v721, %v1055
  %v1088 = vmul.f32 %v723, %v1056
  %v1089 = vmul.f32 %v726, %v1057
  %v1090 = vmul.f32 %v728, %v1058
  %v1091 = vmul.f32 %v731, %v1059
  %v1092 = vmul.f32 %v733, %v1060
  %v1093 = vmul.f32 %v736, %v1061
  %v1094 = vmul.f32 %v738, %v1062
  %v1095 = vmul.f32 %v741, %v1063
  %v1096 = vmul.f32 %v743, %v1064
  %v1097 = vpack.c.bf16 %v1066, %v1065
  %v1098 = vpack.c.bf16 %v1068, %v1067
  %v1099 = vpack.c.bf16 %v1070, %v1069
  %v1100 = vpack.c.bf16 %v1072, %v1071
  %v1101 = vpack.c.bf16 %v1074, %v1073
  %v1102 = vpack.c.bf16 %v1076, %v1075
  %v1103 = vpack.c.bf16 %v1078, %v1077
  %v1104 = vpack.c.bf16 %v1080, %v1079
  %v1105 = vpack.c.bf16 %v1082, %v1081
  %v1106 = vpack.c.bf16 %v1084, %v1083
  %v1107 = vpack.c.bf16 %v1086, %v1085
  %v1108 = vpack.c.bf16 %v1088, %v1087
  %v1109 = vpack.c.bf16 %v1090, %v1089
  %v1110 = vpack.c.bf16 %v1092, %v1091
  %v1111 = vpack.c.bf16 %v1094, %v1093
  %v1112 = vpack.c.bf16 %v1096, %v1095
  %v1113 = vld [vmem:[%s5] sm:$0xff]
  %v1114 = vld [vmem:[%s5 + $0x8] sm:$0xff]
  %v1115 = vld [vmem:[%s5 + $0x10] sm:$0xff]
  %v1116 = vld [vmem:[%s5 + $0x18] sm:$0xff]
  %v1117 = vld [vmem:[%s5 + $0x20] sm:$0xff]
  %v1118 = vld [vmem:[%s5 + $0x28] sm:$0xff]
  %v1119 = vld [vmem:[%s5 + $0x30] sm:$0xff]
  %v1120 = vld [vmem:[%s5 + $0x38] sm:$0xff]
  %v1121 = vpack.c.bf16 %v1114, %v1113
  %v1122 = vpack.c.bf16 %v1116, %v1115
  %v1123 = vpack.c.bf16 %v1118, %v1117
  %v1124 = vpack.c.bf16 %v1120, %v1119
  %v1125 = vld [vmem:[%s6] sm:$0x1]
  %v1127 = vperm.slane %v1125, 0
  %v1130 = vsel %vm607, %v1097, 0
  %v1133 = vsel %vm607, %v1098, 0
  %v1136 = vsel %vm607, %v1099, 0
  %v1139 = vsel %vm607, %v1100, 0
  %v1142 = vsel %vm607, %v1101, 0
  %v1145 = vsel %vm607, %v1102, 0
  %v1148 = vsel %vm607, %v1103, 0
  %v1151 = vsel %vm607, %v1104, 0
  %v1154 = vsel %vm607, %v1105, 0
  %v1157 = vsel %vm607, %v1106, 0
  %v1160 = vsel %vm607, %v1107, 0
  %v1163 = vsel %vm607, %v1108, 0
  %v1166 = vsel %vm607, %v1109, 0
  %v1169 = vsel %vm607, %v1110, 0
  %v1172 = vsel %vm607, %v1111, 0
  %v1175 = vsel %vm607, %v1112, 0
  %1177 = vmatpush.bf16.msra.mxu0 0
  %1178 = vmatpush.bf16.msra.mxu0 0
  %1179 = vmatpush.bf16.msra.mxu0 0
  %1180 = vmatpush.bf16.msra.mxu0 0
  %1181 = vmatpush.bf16.msra.mxu0 %v1124
  %1182 = vmatpush.bf16.msra.mxu0 %v1123
  %1183 = vmatpush.bf16.msra.mxu0 %v1122
  %1184 = vmatpush.bf16.msra.mxu0 %v1121
  %1185 = vmatmul.bf16.gmra.mxu0 %v1130
  %v1186 = vpop.f32.mrf.mxu0
  %v1187 = vadd.f32 %v1127, %v1186
  %v1188 = vpop.f32.mrf.mxu0
  %v1189 = vadd.f32 %v1127, %v1188
  %1190 = vmatmul.bf16.gmra.mxu0 %v1133
  %v1191 = vpop.f32.mrf.mxu0
  %v1192 = vadd.f32 %v1127, %v1191
  %v1193 = vpop.f32.mrf.mxu0
  %v1194 = vadd.f32 %v1127, %v1193
  %1195 = vmatmul.bf16.gmra.mxu0 %v1136
  %v1196 = vpop.f32.mrf.mxu0
  %v1197 = vadd.f32 %v1127, %v1196
  %v1198 = vpop.f32.mrf.mxu0
  %v1199 = vadd.f32 %v1127, %v1198
  %1200 = vmatmul.bf16.gmra.mxu0 %v1139
  %v1201 = vpop.f32.mrf.mxu0
  %v1202 = vadd.f32 %v1127, %v1201
  %v1203 = vpop.f32.mrf.mxu0
  %v1204 = vadd.f32 %v1127, %v1203
  %1205 = vmatmul.bf16.gmra.mxu0 %v1142
  %v1206 = vpop.f32.mrf.mxu0
  %v1207 = vadd.f32 %v1127, %v1206
  %v1208 = vpop.f32.mrf.mxu0
  %v1209 = vadd.f32 %v1127, %v1208
  %1210 = vmatmul.bf16.gmra.mxu0 %v1145
  %v1211 = vpop.f32.mrf.mxu0
  %v1212 = vadd.f32 %v1127, %v1211
  %v1213 = vpop.f32.mrf.mxu0
  %v1214 = vadd.f32 %v1127, %v1213
  %1215 = vmatmul.bf16.gmra.mxu0 %v1148
  %v1216 = vpop.f32.mrf.mxu0
  %v1217 = vadd.f32 %v1127, %v1216
  %v1218 = vpop.f32.mrf.mxu0
  %v1219 = vadd.f32 %v1127, %v1218
  %1220 = vmatmul.bf16.gmra.mxu0 %v1151
  %v1221 = vpop.f32.mrf.mxu0
  %v1222 = vadd.f32 %v1127, %v1221
  %v1223 = vpop.f32.mrf.mxu0
  %v1224 = vadd.f32 %v1127, %v1223
  %1225 = vmatmul.bf16.gmra.mxu0 %v1154
  %v1226 = vpop.f32.mrf.mxu0
  %v1227 = vadd.f32 %v1127, %v1226
  %v1228 = vpop.f32.mrf.mxu0
  %v1229 = vadd.f32 %v1127, %v1228
  %1230 = vmatmul.bf16.gmra.mxu0 %v1157
  %v1231 = vpop.f32.mrf.mxu0
  %v1232 = vadd.f32 %v1127, %v1231
  %v1233 = vpop.f32.mrf.mxu0
  %v1234 = vadd.f32 %v1127, %v1233
  %1235 = vmatmul.bf16.gmra.mxu0 %v1160
  %v1236 = vpop.f32.mrf.mxu0
  %v1237 = vadd.f32 %v1127, %v1236
  %v1238 = vpop.f32.mrf.mxu0
  %v1239 = vadd.f32 %v1127, %v1238
  %1240 = vmatmul.bf16.gmra.mxu0 %v1163
  %v1241 = vpop.f32.mrf.mxu0
  %v1242 = vadd.f32 %v1127, %v1241
  %v1243 = vpop.f32.mrf.mxu0
  %v1244 = vadd.f32 %v1127, %v1243
  %1245 = vmatmul.bf16.gmra.mxu0 %v1166
  %v1246 = vpop.f32.mrf.mxu0
  %v1247 = vadd.f32 %v1127, %v1246
  %v1248 = vpop.f32.mrf.mxu0
  %v1249 = vadd.f32 %v1127, %v1248
  %1250 = vmatmul.bf16.gmra.mxu0 %v1169
  %v1251 = vpop.f32.mrf.mxu0
  %v1252 = vadd.f32 %v1127, %v1251
  %v1253 = vpop.f32.mrf.mxu0
  %v1254 = vadd.f32 %v1127, %v1253
  %1255 = vmatmul.bf16.gmra.mxu0 %v1172
  %v1256 = vpop.f32.mrf.mxu0
  %v1257 = vadd.f32 %v1127, %v1256
  %v1258 = vpop.f32.mrf.mxu0
  %v1259 = vadd.f32 %v1127, %v1258
  %1260 = vmatmul.bf16.gmra.mxu0 %v1175
  %v1261 = vpop.f32.mrf.mxu0
  %v1262 = vadd.f32 %v1127, %v1261
  %v1263 = vpop.f32.mrf.mxu0
  %v1264 = vadd.f32 %v1127, %v1263
  %1265 = vdwg.mxu0
  %v1266 = vmax.f32 %v1187, 0.0
  %v1267 = vmax.f32 %v1189, 0.0
  %v1268 = vmax.f32 %v1192, 0.0
  %v1269 = vmax.f32 %v1194, 0.0
  %v1270 = vmax.f32 %v1197, 0.0
  %v1271 = vmax.f32 %v1199, 0.0
  %v1272 = vmax.f32 %v1202, 0.0
  %v1273 = vmax.f32 %v1204, 0.0
  %v1274 = vmax.f32 %v1207, 0.0
  %v1275 = vmax.f32 %v1209, 0.0
  %v1276 = vmax.f32 %v1212, 0.0
  %v1277 = vmax.f32 %v1214, 0.0
  %v1278 = vmax.f32 %v1217, 0.0
  %v1279 = vmax.f32 %v1219, 0.0
  %v1280 = vmax.f32 %v1222, 0.0
  %v1281 = vmax.f32 %v1224, 0.0
  %v1282 = vmax.f32 %v1227, 0.0
  %v1283 = vmax.f32 %v1229, 0.0
  %v1284 = vmax.f32 %v1232, 0.0
  %v1285 = vmax.f32 %v1234, 0.0
  %v1286 = vmax.f32 %v1237, 0.0
  %v1287 = vmax.f32 %v1239, 0.0
  %v1288 = vmax.f32 %v1242, 0.0
  %v1289 = vmax.f32 %v1244, 0.0
  %v1290 = vmax.f32 %v1247, 0.0
  %v1291 = vmax.f32 %v1249, 0.0
  %v1292 = vmax.f32 %v1252, 0.0
  %v1293 = vmax.f32 %v1254, 0.0
  %v1294 = vmax.f32 %v1257, 0.0
  %v1295 = vmax.f32 %v1259, 0.0
  %v1296 = vmax.f32 %v1262, 0.0
  %v1297 = vmax.f32 %v1264, 0.0
  %v1298 = vand.u32 2147483647, %v1187
  %v1299 = vand.u32 2147483647, %v1189
  %v1300 = vand.u32 2147483647, %v1192
  %v1301 = vand.u32 2147483647, %v1194
  %v1302 = vand.u32 2147483647, %v1197
  %v1303 = vand.u32 2147483647, %v1199
  %v1304 = vand.u32 2147483647, %v1202
  %v1305 = vand.u32 2147483647, %v1204
  %v1306 = vand.u32 2147483647, %v1207
  %v1307 = vand.u32 2147483647, %v1209
  %v1308 = vand.u32 2147483647, %v1212
  %v1309 = vand.u32 2147483647, %v1214
  %v1310 = vand.u32 2147483647, %v1217
  %v1311 = vand.u32 2147483647, %v1219
  %v1312 = vand.u32 2147483647, %v1222
  %v1313 = vand.u32 2147483647, %v1224
  %v1314 = vand.u32 2147483647, %v1227
  %v1315 = vand.u32 2147483647, %v1229
  %v1316 = vand.u32 2147483647, %v1232
  %v1317 = vand.u32 2147483647, %v1234
  %v1318 = vand.u32 2147483647, %v1237
  %v1319 = vand.u32 2147483647, %v1239
  %v1320 = vand.u32 2147483647, %v1242
  %v1321 = vand.u32 2147483647, %v1244
  %v1322 = vand.u32 2147483647, %v1247
  %v1323 = vand.u32 2147483647, %v1249
  %v1324 = vand.u32 2147483647, %v1252
  %v1325 = vand.u32 2147483647, %v1254
  %v1326 = vand.u32 2147483647, %v1257
  %v1327 = vand.u32 2147483647, %v1259
  %v1328 = vand.u32 2147483647, %v1262
  %v1329 = vand.u32 2147483647, %v1264
  %v1330 = vsub.f32 0.0, %v1298
  %v1331 = vsub.f32 0.0, %v1299
  %v1332 = vsub.f32 0.0, %v1300
  %v1333 = vsub.f32 0.0, %v1301
  %v1334 = vsub.f32 0.0, %v1302
  %v1335 = vsub.f32 0.0, %v1303
  %v1336 = vsub.f32 0.0, %v1304
  %v1337 = vsub.f32 0.0, %v1305
  %v1338 = vsub.f32 0.0, %v1306
  %v1339 = vsub.f32 0.0, %v1307
  %v1340 = vsub.f32 0.0, %v1308
  %v1341 = vsub.f32 0.0, %v1309
  %v1342 = vsub.f32 0.0, %v1310
  %v1343 = vsub.f32 0.0, %v1311
  %v1344 = vsub.f32 0.0, %v1312
  %v1345 = vsub.f32 0.0, %v1313
  %v1346 = vsub.f32 0.0, %v1314
  %v1347 = vsub.f32 0.0, %v1315
  %v1348 = vsub.f32 0.0, %v1316
  %v1349 = vsub.f32 0.0, %v1317
  %v1350 = vsub.f32 0.0, %v1318
  %v1351 = vsub.f32 0.0, %v1319
  %v1352 = vsub.f32 0.0, %v1320
  %v1353 = vsub.f32 0.0, %v1321
  %v1354 = vsub.f32 0.0, %v1322
  %v1355 = vsub.f32 0.0, %v1323
  %v1356 = vsub.f32 0.0, %v1324
  %v1357 = vsub.f32 0.0, %v1325
  %v1358 = vsub.f32 0.0, %v1326
  %v1359 = vsub.f32 0.0, %v1327
  %v1360 = vsub.f32 0.0, %v1328
  %v1361 = vsub.f32 0.0, %v1329
  %v1362 = vmul.f32 %v1330, 1.442695
  %v1363 = vpow.pop %v1362
  %v1364 = vmul.f32 %v1331, 1.442695
  %v1365 = vpow.pop %v1364
  %v1366 = vmul.f32 %v1332, 1.442695
  %v1367 = vpow.pop %v1366
  %v1368 = vmul.f32 %v1333, 1.442695
  %v1369 = vpow.pop %v1368
  %v1370 = vmul.f32 %v1334, 1.442695
  %v1371 = vpow.pop %v1370
  %v1372 = vmul.f32 %v1335, 1.442695
  %v1373 = vpow.pop %v1372
  %v1374 = vmul.f32 %v1336, 1.442695
  %v1375 = vpow.pop %v1374
  %v1376 = vmul.f32 %v1337, 1.442695
  %v1377 = vpow.pop %v1376
  %v1378 = vmul.f32 %v1338, 1.442695
  %v1379 = vpow.pop %v1378
  %v1380 = vmul.f32 %v1339, 1.442695
  %v1381 = vpow.pop %v1380
  %v1382 = vmul.f32 %v1340, 1.442695
  %v1383 = vpow.pop %v1382
  %v1384 = vmul.f32 %v1341, 1.442695
  %v1385 = vpow.pop %v1384
  %v1386 = vmul.f32 %v1342, 1.442695
  %v1387 = vpow.pop %v1386
  %v1388 = vmul.f32 %v1343, 1.442695
  %v1389 = vpow.pop %v1388
  %v1390 = vmul.f32 %v1344, 1.442695
  %v1391 = vpow.pop %v1390
  %v1392 = vmul.f32 %v1345, 1.442695
  %v1393 = vpow.pop %v1392
  %v1394 = vmul.f32 %v1346, 1.442695
  %v1395 = vpow.pop %v1394
  %v1396 = vmul.f32 %v1347, 1.442695
  %v1397 = vpow.pop %v1396
  %v1398 = vmul.f32 %v1348, 1.442695
  %v1399 = vpow.pop %v1398
  %v1400 = vmul.f32 %v1349, 1.442695
  %v1401 = vpow.pop %v1400
  %v1402 = vmul.f32 %v1350, 1.442695
  %v1403 = vpow.pop %v1402
  %v1404 = vmul.f32 %v1351, 1.442695
  %v1405 = vpow.pop %v1404
  %v1406 = vmul.f32 %v1352, 1.442695
  %v1407 = vpow.pop %v1406
  %v1408 = vmul.f32 %v1353, 1.442695
  %v1409 = vpow.pop %v1408
  %v1410 = vmul.f32 %v1354, 1.442695
  %v1411 = vpow.pop %v1410
  %v1412 = vmul.f32 %v1355, 1.442695
  %v1413 = vpow.pop %v1412
  %v1414 = vmul.f32 %v1356, 1.442695
  %v1415 = vpow.pop %v1414
  %v1416 = vmul.f32 %v1357, 1.442695
  %v1417 = vpow.pop %v1416
  %v1418 = vmul.f32 %v1358, 1.442695
  %v1419 = vpow.pop %v1418
  %v1420 = vmul.f32 %v1359, 1.442695
  %v1421 = vpow.pop %v1420
  %v1422 = vmul.f32 %v1360, 1.442695
  %v1423 = vpow.pop %v1422
  %v1424 = vmul.f32 %v1361, 1.442695
  %v1425 = vpow.pop %v1424
  %v1426 = vadd.f32 %v1363, 1.0
  %v1427 = vadd.f32 %v1365, 1.0
  %v1428 = vadd.f32 %v1367, 1.0
  %v1429 = vadd.f32 %v1369, 1.0
  %v1430 = vadd.f32 %v1371, 1.0
  %v1431 = vadd.f32 %v1373, 1.0
  %v1432 = vadd.f32 %v1375, 1.0
  %v1433 = vadd.f32 %v1377, 1.0
  %v1434 = vadd.f32 %v1379, 1.0
  %v1435 = vadd.f32 %v1381, 1.0
  %v1436 = vadd.f32 %v1383, 1.0
  %v1437 = vadd.f32 %v1385, 1.0
  %v1438 = vadd.f32 %v1387, 1.0
  %v1439 = vadd.f32 %v1389, 1.0
  %v1440 = vadd.f32 %v1391, 1.0
  %v1441 = vadd.f32 %v1393, 1.0
  %v1442 = vadd.f32 %v1395, 1.0
  %v1443 = vadd.f32 %v1397, 1.0
  %v1444 = vadd.f32 %v1399, 1.0
  %v1445 = vadd.f32 %v1401, 1.0
  %v1446 = vadd.f32 %v1403, 1.0
  %v1447 = vadd.f32 %v1405, 1.0
  %v1448 = vadd.f32 %v1407, 1.0
  %v1449 = vadd.f32 %v1409, 1.0
  %v1450 = vadd.f32 %v1411, 1.0
  %v1451 = vadd.f32 %v1413, 1.0
  %v1452 = vadd.f32 %v1415, 1.0
  %v1453 = vadd.f32 %v1417, 1.0
  %v1454 = vadd.f32 %v1419, 1.0
  %v1455 = vadd.f32 %v1421, 1.0
  %v1456 = vadd.f32 %v1423, 1.0
  %v1457 = vadd.f32 %v1425, 1.0
  %v1458 = vlog2.pop %v1426
  %v1459 = vmul.f32 %v1458, 0.6931472
  %v1460 = vlog2.pop %v1427
  %v1461 = vmul.f32 %v1460, 0.6931472
  %v1462 = vlog2.pop %v1428
  %v1463 = vmul.f32 %v1462, 0.6931472
  %v1464 = vlog2.pop %v1429
  %v1465 = vmul.f32 %v1464, 0.6931472
  %v1466 = vlog2.pop %v1430
  %v1467 = vmul.f32 %v1466, 0.6931472
  %v1468 = vlog2.pop %v1431
  %v1469 = vmul.f32 %v1468, 0.6931472
  %v1470 = vlog2.pop %v1432
  %v1471 = vmul.f32 %v1470, 0.6931472
  %v1472 = vlog2.pop %v1433
  %v1473 = vmul.f32 %v1472, 0.6931472
  %v1474 = vlog2.pop %v1434
  %v1475 = vmul.f32 %v1474, 0.6931472
  %v1476 = vlog2.pop %v1435
  %v1477 = vmul.f32 %v1476, 0.6931472
  %v1478 = vlog2.pop %v1436
  %v1479 = vmul.f32 %v1478, 0.6931472
  %v1480 = vlog2.pop %v1437
  %v1481 = vmul.f32 %v1480, 0.6931472
  %v1482 = vlog2.pop %v1438
  %v1483 = vmul.f32 %v1482, 0.6931472
  %v1484 = vlog2.pop %v1439
  %v1485 = vmul.f32 %v1484, 0.6931472
  %v1486 = vlog2.pop %v1440
  %v1487 = vmul.f32 %v1486, 0.6931472
  %v1488 = vlog2.pop %v1441
  %v1489 = vmul.f32 %v1488, 0.6931472
  %v1490 = vlog2.pop %v1442
  %v1491 = vmul.f32 %v1490, 0.6931472
  %v1492 = vlog2.pop %v1443
  %v1493 = vmul.f32 %v1492, 0.6931472
  %v1494 = vlog2.pop %v1444
  %v1495 = vmul.f32 %v1494, 0.6931472
  %v1496 = vlog2.pop %v1445
  %v1497 = vmul.f32 %v1496, 0.6931472
  %v1498 = vlog2.pop %v1446
  %v1499 = vmul.f32 %v1498, 0.6931472
  %v1500 = vlog2.pop %v1447
  %v1501 = vmul.f32 %v1500, 0.6931472
  %v1502 = vlog2.pop %v1448
  %v1503 = vmul.f32 %v1502, 0.6931472
  %v1504 = vlog2.pop %v1449
  %v1505 = vmul.f32 %v1504, 0.6931472
  %v1506 = vlog2.pop %v1450
  %v1507 = vmul.f32 %v1506, 0.6931472
  %v1508 = vlog2.pop %v1451
  %v1509 = vmul.f32 %v1508, 0.6931472
  %v1510 = vlog2.pop %v1452
  %v1511 = vmul.f32 %v1510, 0.6931472
  %v1512 = vlog2.pop %v1453
  %v1513 = vmul.f32 %v1512, 0.6931472
  %v1514 = vlog2.pop %v1454
  %v1515 = vmul.f32 %v1514, 0.6931472
  %v1516 = vlog2.pop %v1455
  %v1517 = vmul.f32 %v1516, 0.6931472
  %v1518 = vlog2.pop %v1456
  %v1519 = vmul.f32 %v1518, 0.6931472
  %v1520 = vlog2.pop %v1457
  %v1521 = vmul.f32 %v1520, 0.6931472
  %v1522 = vadd.f32 %v1266, %v1459
  %v1523 = vadd.f32 %v1267, %v1461
  %v1524 = vadd.f32 %v1268, %v1463
  %v1525 = vadd.f32 %v1269, %v1465
  %v1526 = vadd.f32 %v1270, %v1467
  %v1527 = vadd.f32 %v1271, %v1469
  %v1528 = vadd.f32 %v1272, %v1471
  %v1529 = vadd.f32 %v1273, %v1473
  %v1530 = vadd.f32 %v1274, %v1475
  %v1531 = vadd.f32 %v1275, %v1477
  %v1532 = vadd.f32 %v1276, %v1479
  %v1533 = vadd.f32 %v1277, %v1481
  %v1534 = vadd.f32 %v1278, %v1483
  %v1535 = vadd.f32 %v1279, %v1485
  %v1536 = vadd.f32 %v1280, %v1487
  %v1537 = vadd.f32 %v1281, %v1489
  %v1538 = vadd.f32 %v1282, %v1491
  %v1539 = vadd.f32 %v1283, %v1493
  %v1540 = vadd.f32 %v1284, %v1495
  %v1541 = vadd.f32 %v1285, %v1497
  %v1542 = vadd.f32 %v1286, %v1499
  %v1543 = vadd.f32 %v1287, %v1501
  %v1544 = vadd.f32 %v1288, %v1503
  %v1545 = vadd.f32 %v1289, %v1505
  %v1546 = vadd.f32 %v1290, %v1507
  %v1547 = vadd.f32 %v1291, %v1509
  %v1548 = vadd.f32 %v1292, %v1511
  %v1549 = vadd.f32 %v1293, %v1513
  %v1550 = vadd.f32 %v1294, %v1515
  %v1551 = vadd.f32 %v1295, %v1517
  %v1552 = vadd.f32 %v1296, %v1519
  %v1553 = vadd.f32 %v1297, %v1521
  %v1554 = vtanh.pop %v1522
  %v1555 = vtanh.pop %v1523
  %v1556 = vtanh.pop %v1524
  %v1557 = vtanh.pop %v1525
  %v1558 = vtanh.pop %v1526
  %v1559 = vtanh.pop %v1527
  %v1560 = vtanh.pop %v1528
  %v1561 = vtanh.pop %v1529
  %v1562 = vtanh.pop %v1530
  %v1563 = vtanh.pop %v1531
  %v1564 = vtanh.pop %v1532
  %v1565 = vtanh.pop %v1533
  %v1566 = vtanh.pop %v1534
  %v1567 = vtanh.pop %v1535
  %v1568 = vtanh.pop %v1536
  %v1569 = vtanh.pop %v1537
  %v1570 = vtanh.pop %v1538
  %v1571 = vtanh.pop %v1539
  %v1572 = vtanh.pop %v1540
  %v1573 = vtanh.pop %v1541
  %v1574 = vtanh.pop %v1542
  %v1575 = vtanh.pop %v1543
  %v1576 = vtanh.pop %v1544
  %v1577 = vtanh.pop %v1545
  %v1578 = vtanh.pop %v1546
  %v1579 = vtanh.pop %v1547
  %v1580 = vtanh.pop %v1548
  %v1581 = vtanh.pop %v1549
  %v1582 = vtanh.pop %v1550
  %v1583 = vtanh.pop %v1551
  %v1584 = vtanh.pop %v1552
  %v1585 = vtanh.pop %v1553
  %v1586 = vmul.f32 %v1187, %v1554
  %v1587 = vmul.f32 %v1189, %v1555
  %v1588 = vmul.f32 %v1192, %v1556
  %v1589 = vmul.f32 %v1194, %v1557
  %v1590 = vmul.f32 %v1197, %v1558
  %v1591 = vmul.f32 %v1199, %v1559
  %v1592 = vmul.f32 %v1202, %v1560
  %v1593 = vmul.f32 %v1204, %v1561
  %v1594 = vmul.f32 %v1207, %v1562
  %v1595 = vmul.f32 %v1209, %v1563
  %v1596 = vmul.f32 %v1212, %v1564
  %v1597 = vmul.f32 %v1214, %v1565
  %v1598 = vmul.f32 %v1217, %v1566
  %v1599 = vmul.f32 %v1219, %v1567
  %v1600 = vmul.f32 %v1222, %v1568
  %v1601 = vmul.f32 %v1224, %v1569
  %v1602 = vmul.f32 %v1227, %v1570
  %v1603 = vmul.f32 %v1229, %v1571
  %v1604 = vmul.f32 %v1232, %v1572
  %v1605 = vmul.f32 %v1234, %v1573
  %v1606 = vmul.f32 %v1237, %v1574
  %v1607 = vmul.f32 %v1239, %v1575
  %v1608 = vmul.f32 %v1242, %v1576
  %v1609 = vmul.f32 %v1244, %v1577
  %v1610 = vmul.f32 %v1247, %v1578
  %v1611 = vmul.f32 %v1249, %v1579
  %v1612 = vmul.f32 %v1252, %v1580
  %v1613 = vmul.f32 %v1254, %v1581
  %v1614 = vmul.f32 %v1257, %v1582
  %v1615 = vmul.f32 %v1259, %v1583
  %v1616 = vmul.f32 %v1262, %v1584
  %v1617 = vmul.f32 %v1264, %v1585
  %vm1618 = vcmask 130048
  %1619 = vst.msk [vmem:[%s7] sm:$0xff] %vm1618, %v1586
  %1620 = vst.msk [vmem:[%s7 + $0x8] sm:$0xff] %vm1618, %v1587
  %1621 = vst.msk [vmem:[%s7 + $0x10] sm:$0xff] %vm1618, %v1588
  %1622 = vst.msk [vmem:[%s7 + $0x18] sm:$0xff] %vm1618, %v1589
  %1623 = vst.msk [vmem:[%s7 + $0x20] sm:$0xff] %vm1618, %v1590
  %1624 = vst.msk [vmem:[%s7 + $0x28] sm:$0xff] %vm1618, %v1591
  %1625 = vst.msk [vmem:[%s7 + $0x30] sm:$0xff] %vm1618, %v1592
  %1626 = vst.msk [vmem:[%s7 + $0x38] sm:$0xff] %vm1618, %v1593
  %1627 = vst.msk [vmem:[%s7 + $0x40] sm:$0xff] %vm1618, %v1594
  %1628 = vst.msk [vmem:[%s7 + $0x48] sm:$0xff] %vm1618, %v1595
  %1629 = vst.msk [vmem:[%s7 + $0x50] sm:$0xff] %vm1618, %v1596
  %1630 = vst.msk [vmem:[%s7 + $0x58] sm:$0xff] %vm1618, %v1597
  %1631 = vst.msk [vmem:[%s7 + $0x60] sm:$0xff] %vm1618, %v1598
  %1632 = vst.msk [vmem:[%s7 + $0x68] sm:$0xff] %vm1618, %v1599
  %1633 = vst.msk [vmem:[%s7 + $0x70] sm:$0xff] %vm1618, %v1600
  %1634 = vst.msk [vmem:[%s7 + $0x78] sm:$0xff] %vm1618, %v1601
  %1635 = vst.msk [vmem:[%s7 + $0x80] sm:$0xff] %vm1618, %v1602
  %1636 = vst.msk [vmem:[%s7 + $0x88] sm:$0xff] %vm1618, %v1603
  %1637 = vst.msk [vmem:[%s7 + $0x90] sm:$0xff] %vm1618, %v1604
  %1638 = vst.msk [vmem:[%s7 + $0x98] sm:$0xff] %vm1618, %v1605
  %1639 = vst.msk [vmem:[%s7 + $0xa0] sm:$0xff] %vm1618, %v1606
  %1640 = vst.msk [vmem:[%s7 + $0xa8] sm:$0xff] %vm1618, %v1607
  %1641 = vst.msk [vmem:[%s7 + $0xb0] sm:$0xff] %vm1618, %v1608
  %1642 = vst.msk [vmem:[%s7 + $0xb8] sm:$0xff] %vm1618, %v1609
  %1643 = vst.msk [vmem:[%s7 + $0xc0] sm:$0xff] %vm1618, %v1610
  %1644 = vst.msk [vmem:[%s7 + $0xc8] sm:$0xff] %vm1618, %v1611
  %1645 = vst.msk [vmem:[%s7 + $0xd0] sm:$0xff] %vm1618, %v1612
  %1646 = vst.msk [vmem:[%s7 + $0xd8] sm:$0xff] %vm1618, %v1613
  %1647 = vst.msk [vmem:[%s7 + $0xe0] sm:$0xff] %vm1618, %v1614
  %1648 = vst.msk [vmem:[%s7 + $0xe8] sm:$0xff] %vm1618, %v1615
  %1649 = vst.msk [vmem:[%s7 + $0xf0] sm:$0xff] %vm1618, %v1616
  %1650 = vst.msk [vmem:[%s7 + $0xf8] sm:$0xff] %vm1618, %v1617
  // Predicated region
  $region30: #{mlp_forward.1} parent=0 // pred_check
    _
  $region31: #{mlp_forward.1} parent=0 // pred_check_branch
    %1652 = sbr.rel (0) target = $region33
  $region32: #{mlp_forward.1} parent=0 // pred_region
    _
  $region33: #{mlp_forward.1} parent=0 // pred_fallthru
    _
  // Predicated region
  $region34: #{mlp_forward.1} parent=0 // pred_check
    _
  $region35: #{mlp_forward.1} parent=0 // pred_check_branch
    %1654 = sbr.rel (0) target = $region37
  $region36: #{mlp_forward.1} parent=0 // pred_region
    _
  $region37: #{mlp_forward.1} parent=0 // pred_fallthru
    _

</llo_original>
